<compile_context>
chip_gen: v7x
topology: tpu7x:2x2x1
jax: 0.10.0
libtpu: 0.0.40
codegen_flags: <defaults>
</compile_context>

<pallas_src>
import functools

import jax
import jax.numpy as jnp
from jax.experimental import pallas as pl
from jax.experimental.pallas import tpu as pltpu

IN_CHANNELS = 18
BOARD_SIZE = 9
OUTPUT_ACTIONS = BOARD_SIZE ** 2 + 1  # 82
BN_EPS = 1e-5

C1_LANES = 128       # conv block output, padded from 24 channels
POL_LANES = 128      # policy output, padded from 82 actions
VAL_LANES = 256      # value-head prefix output, padded from 200 features

_VMEM = pl.BlockSpec(memory_space=pltpu.MemorySpace.VMEM)


# --------------------------------------------------------------------------
# Single fused kernel:
#   Conv2d(18->24,k=3,s=3) + BatchNorm2d(24) + ReLU + MaxPool2d(2,2,pad=1)
#   Policy head: Linear(400,300)+ReLU -> Linear(300,200)+ReLU
#                -> Linear(200,82) -> Softmax(dim=1)
#   Value head (computable prefix): Linear(400,200)+ReLU
# --------------------------------------------------------------------------
def _pvnet_fused_kernel(patches_ref, wc_ref, scale_ref, shift_ref,
                        x_ref, pw1_ref, pb1_ref, pw2_ref, pb2_ref,
                        pw3_ref, pb3_ref, vw1_ref, vb1_ref,
                        c1_ref, pol_ref, val_ref, *, n_batch):
    n = n_batch

    # ---- conv s1 (im2col matmul) + folded inference BN + ReLU --------------
    # patches rows are position-major: row = p*N + n,  p = oh*3 + ow.
    conv = jnp.dot(patches_ref[...], wc_ref[...],
                   preferred_element_type=jnp.float32)            # (9N, 128)
    y = jnp.maximum(conv * scale_ref[...] + shift_ref[...], 0.0)

    # ---- MaxPool2d(kernel=2, stride=2, padding=1) on the 3x3 grid ----------
    # Vectorized over the batch: each pooled cell is a contiguous row slice.
    o00 = y[0 * n:1 * n, :]                                       # (0,0)
    o01 = jnp.maximum(y[1 * n:2 * n, :], y[2 * n:3 * n, :])       # (0,1)
    o10 = jnp.maximum(y[3 * n:4 * n, :], y[6 * n:7 * n, :])       # (1,0)
    o11 = jnp.maximum(jnp.maximum(y[4 * n:5 * n, :], y[5 * n:6 * n, :]),
                      jnp.maximum(y[7 * n:8 * n, :], y[8 * n:9 * n, :]))
    c1_ref[...] = jnp.concatenate([o00, o01, o10, o11], axis=0)   # (4N, 128)

    # ---- policy head -------------------------------------------------------
    xb = x_ref[...].astype(jnp.bfloat16)                          # (N, 400)
    h = jnp.maximum(
        jnp.dot(xb, pw1_ref[...], preferred_element_type=jnp.float32)
        + pb1_ref[...], 0.0)
    h = jnp.maximum(
        jnp.dot(h.astype(jnp.bfloat16), pw2_ref[...],
                preferred_element_type=jnp.float32) + pb2_ref[...], 0.0)
    logits = jnp.dot(h.astype(jnp.bfloat16), pw3_ref[...],
                     preferred_element_type=jnp.float32) + pb3_ref[...]
    # mask the padded lanes (>= 82) out of the softmax
    lane = jax.lax.broadcasted_iota(jnp.int32, logits.shape, 1)
    logits = jnp.where(lane < OUTPUT_ACTIONS, logits, -1e30)
    # nn.Softmax() with implicit dim -> dim=1 for 2-D input (stable form)
    m = jnp.max(logits, axis=-1, keepdims=True)
    e = jnp.exp(logits - m)
    denom = jnp.sum(e, axis=-1, keepdims=True)
    pol_ref[...] = e * pl.reciprocal(denom, approx=True)

    # ---- value head (computable prefix): Linear(400,200) + ReLU ------------
    val_ref[...] = jnp.maximum(
        jnp.dot(xb, vw1_ref[...], preferred_element_type=jnp.float32)
        + vb1_ref[...], 0.0)
    # TODO(synk): the remaining value layers Linear(500, 0) -> ReLU ->
    # Linear(50, 1) are shape-incompatible with the 200-feature output above
    # (they raise in PyTorch), so they are not implemented.


# --------------------------------------------------------------------------
# Wrapper helpers
# --------------------------------------------------------------------------
def _im2col_3x3_s3_posmajor(x_nchw):
    """(N, C, 9, 9) -> (9*N, C*9).

    Rows are position-major: row = (oh*3 + ow)*N + n, so the kernel can pool
    with contiguous row slices.  Columns are in PyTorch (c, kh, kw) order.
    """
    n, c, h, w = x_nchw.shape
    oh, ow = h // 3, w // 3
    xr = x_nchw.reshape(n, c, oh, 3, ow, 3)       # (n, c, oh, kh, ow, kw)
    xr = xr.transpose(2, 4, 0, 1, 3, 5)           # (oh, ow, n, c, kh, kw)
    return xr.reshape(oh * ow * n, c * 9), n


def _pad_last(a, target):
    return jnp.pad(a, [(0, 0)] * (a.ndim - 1) + [(0, target - a.shape[-1])])


# --------------------------------------------------------------------------
# Forward
# --------------------------------------------------------------------------
def pvnet_forward(x_nchw, shared_x, params):
    (w_s1, b_s1, gamma1, beta1, mean1, var1) = params["conv1"]
    (pw1, pb1), (pw2, pb2), (pw3, pb3) = params["policy"]
    (vw1, vb1) = params["value"]

    # --- conv block prep (fold conv bias + inference BN into scale/shift) ---
    patches, n = _im2col_3x3_s3_posmajor(x_nchw)
    c_out = w_s1.shape[0]                                         # 24
    w_mat = w_s1.reshape(c_out, -1).T.astype(jnp.float32)         # (162, 24)
    scale = gamma1 / jnp.sqrt(var1 + BN_EPS)                      # (24,)
    shift = (b_s1 - mean1) * scale + beta1                        # (24,)

    # --- lane-dense padding + bf16 weights (f32 accumulation in-kernel) -----
    patches_bf = patches.astype(jnp.bfloat16)                     # (9N, 162)
    wc = _pad_last(w_mat, C1_LANES).astype(jnp.bfloat16)          # (162, 128)
    scale_p = _pad_last(scale.reshape(1, c_out), C1_LANES)        # (1, 128)
    shift_p = _pad_last(shift.reshape(1, c_out), C1_LANES)        # (1, 128)
    pw1_b = pw1.astype(jnp.bfloat16)                              # (400, 300)
    pw2_b = pw2.astype(jnp.bfloat16)                              # (300, 200)
    pw3_b = _pad_last(pw3, POL_LANES).astype(jnp.bfloat16)        # (200, 128)
    pb3_p = _pad_last(pb3, POL_LANES)                             # (1, 128)
    vw1_b = _pad_last(vw1, VAL_LANES).astype(jnp.bfloat16)        # (400, 256)
    vb1_p = _pad_last(vb1, VAL_LANES)                             # (1, 256)

    # TODO(synk): at real batch sizes add a batch grid axis with
    # dimension_semantics=("parallel",) so v7x's second TensorCore is used;
    # at N=2 the per-step overhead would outweigh it.
    c1_pad, pol_pad, val_pad = pl.pallas_call(
        functools.partial(_pvnet_fused_kernel, n_batch=n),
        out_shape=(
            jax.ShapeDtypeStruct((4 * n, C1_LANES), jnp.float32),
            jax.ShapeDtypeStruct((n, POL_LANES), jnp.float32),
            jax.ShapeDtypeStruct((n, VAL_LANES), jnp.float32),
        ),
        in_specs=[_VMEM] * 13,
        out_specs=(_VMEM, _VMEM, _VMEM),
    )(patches_bf, wc, scale_p, shift_p,
      shared_x.astype(jnp.float32),
      pw1_b, pb1, pw2_b, pb2, pw3_b, pb3_p, vw1_b, vb1_p)

    # c1_pad rows are (pooled_pos j, sample n) with j row-major over 2x2.
    c1 = (c1_pad.reshape(2, 2, n, C1_LANES)[:, :, :, :c_out]
          .transpose(2, 3, 0, 1))                                 # (N, 24, 2, 2)
    policy = pol_pad[:, :OUTPUT_ACTIONS]                          # (N, 82)
    value_feat = val_pad[:, :200]                                 # (N, 200)

    # TODO(synk): s2/b2, s3/b3, s4/b4 blocks + residual adds + flatten->400
    # cannot be executed: 2x2 spatial < kernel 3 (PyTorch raises), residual
    # channel counts mismatch (64 vs 24/48), and 400 is not reachable from c4.
    return c1, policy, value_feat


# --------------------------------------------------------------------------
# Deterministic parameter construction (PyTorch-default-like uniform init)
# --------------------------------------------------------------------------
def _uniform(key, shape, fan_in):
    bound = 1.0 / jnp.sqrt(jnp.float32(fan_in))
    return jax.random.uniform(key, shape, jnp.float32, -bound, bound)


def init_params(key):
    ks = jax.random.split(key, 16)
    # conv s1: weight (24, 18, 3, 3), bias (24,)
    w_s1 = _uniform(ks[0], (24, IN_CHANNELS, 3, 3), IN_CHANNELS * 9)
    b_s1 = _uniform(ks[1], (24,), IN_CHANNELS * 9)
    # batchnorm b1 (inference-mode statistics)
    gamma1 = 1.0 + 0.1 * jax.random.normal(ks[2], (24,), jnp.float32)
    beta1 = 0.1 * jax.random.normal(ks[3], (24,), jnp.float32)
    mean1 = 0.1 * jax.random.normal(ks[4], (24,), jnp.float32)
    var1 = 1.0 + 0.1 * jax.random.uniform(ks[5], (24,), jnp.float32)
    # policy head (weights stored as (in, out) == W.T of PyTorch's (out, in))
    pw1 = _uniform(ks[6], (400, 300), 400)
    pb1 = _uniform(ks[7], (1, 300), 400)
    pw2 = _uniform(ks[8], (300, 200), 300)
    pb2 = _uniform(ks[9], (1, 200), 300)
    pw3 = _uniform(ks[10], (200, OUTPUT_ACTIONS), 200)
    pb3 = _uniform(ks[11], (1, OUTPUT_ACTIONS), 200)
    # value head first layer
    vw1 = _uniform(ks[12], (400, 200), 400)
    vb1 = _uniform(ks[13], (1, 200), 400)
    return dict(
        conv1=(w_s1, b_s1, gamma1, beta1, mean1, var1),
        policy=((pw1, pb1), (pw2, pb2), (pw3, pb3)),
        value=(vw1, vb1),
    )


if __name__ == "__main__":
    key = jax.random.PRNGKey(0)
    k_x, k_s, k_p = jax.random.split(key, 3)

    # Natural PVNet input: batch=2, 18 feature planes on a 9x9 board.
    x = jax.random.normal(k_x, (2, IN_CHANNELS, BOARD_SIZE, BOARD_SIZE),
                          jnp.float32)
    # Stand-in for flatten(c4): the broken trunk can never produce the
    # 400-feature vector the heads require, so a deterministic synthetic
    # 400-feature input is used to exercise the head computations.
    shared_x = jax.random.normal(k_s, (2, 400), jnp.float32)

    params = init_params(k_p)

    fwd = jax.jit(pvnet_forward)
    c1, policy, value_feat = fwd(x, shared_x, params)
    jax.block_until_ready((c1, policy, value_feat))

    assert c1.shape == (2, 24, 2, 2)
    assert policy.shape == (2, OUTPUT_ACTIONS)
    assert value_feat.shape == (2, 200)
    # softmax rows must sum to ~1 (approx-reciprocal denominator)
    assert bool(jnp.all(jnp.abs(jnp.sum(policy, axis=-1) - 1.0) < 1e-2))
    assert bool(jnp.all(policy >= 0.0))

    print("KERNEL_OK")
</pallas_src>

<mosaic_0001>
module attributes {stable_mosaic.version = 11 : i64} {
  func.func @_pvnet_fused_kernel(%arg0: memref<18x162xbf16, #tpu.memory_space<vmem>>, %arg1: memref<162x128xbf16, #tpu.memory_space<vmem>>, %arg2: memref<1x128xf32, #tpu.memory_space<vmem>>, %arg3: memref<1x128xf32, #tpu.memory_space<vmem>>, %arg4: memref<2x400xf32, #tpu.memory_space<vmem>>, %arg5: memref<400x300xbf16, #tpu.memory_space<vmem>>, %arg6: memref<1x300xf32, #tpu.memory_space<vmem>>, %arg7: memref<300x200xbf16, #tpu.memory_space<vmem>>, %arg8: memref<1x200xf32, #tpu.memory_space<vmem>>, %arg9: memref<200x128xbf16, #tpu.memory_space<vmem>>, %arg10: memref<1x128xf32, #tpu.memory_space<vmem>>, %arg11: memref<400x256xbf16, #tpu.memory_space<vmem>>, %arg12: memref<1x256xf32, #tpu.memory_space<vmem>>, %arg13: memref<8x128xf32, #tpu.memory_space<vmem>>, %arg14: memref<2x128xf32, #tpu.memory_space<vmem>>, %arg15: memref<2x256xf32, #tpu.memory_space<vmem>>) attributes {dimension_semantics = [], scalar_prefetch = 0 : i64, scratch_operands = 0 : i64, tpu.core_type = #tpu.core_type<tc>} {
    %c0 = arith.constant 0 : index
    %c0_0 = arith.constant 0 : index
    %0 = vector.load %arg0[%c0, %c0_0] : memref<18x162xbf16, #tpu.memory_space<vmem>>, vector<18x162xbf16>
    %c0_1 = arith.constant 0 : index
    %c0_2 = arith.constant 0 : index
    %1 = vector.load %arg1[%c0_1, %c0_2] : memref<162x128xbf16, #tpu.memory_space<vmem>>, vector<162x128xbf16>
    %cst = arith.constant dense<0.000000e+00> : vector<18x128xf32>
    %2 = tpu.matmul %0, %1, %cst {dimension_numbers = #tpu.dot_dimension_numbers<[1], [0], [0], [1], [0, 0, 1, 1], [], []>} : vector<18x162xbf16>, vector<162x128xbf16>, vector<18x128xf32> -> vector<18x128xf32>
    %c0_3 = arith.constant 0 : index
    %c0_4 = arith.constant 0 : index
    %3 = vector.load %arg2[%c0_3, %c0_4] : memref<1x128xf32, #tpu.memory_space<vmem>>, vector<1x128xf32>
    %4 = vector.broadcast %3 : vector<1x128xf32> to vector<18x128xf32>
    %5 = arith.mulf %2, %4 : vector<18x128xf32>
    %c0_5 = arith.constant 0 : index
    %c0_6 = arith.constant 0 : index
    %6 = vector.load %arg3[%c0_5, %c0_6] : memref<1x128xf32, #tpu.memory_space<vmem>>, vector<1x128xf32>
    %7 = vector.broadcast %6 : vector<1x128xf32> to vector<18x128xf32>
    %8 = arith.addf %5, %7 : vector<18x128xf32>
    %cst_7 = arith.constant 0.000000e+00 : f32
    %9 = vector.broadcast %cst_7 : f32 to vector<18x128xf32>
    %10 = arith.maximumf %8, %9 : vector<18x128xf32>
    %11 = vector.extract_strided_slice %10 {offsets = [0, 0], sizes = [2, 128], strides = [1, 1]} : vector<18x128xf32> to vector<2x128xf32>
    %12 = vector.extract_strided_slice %10 {offsets = [2, 0], sizes = [2, 128], strides = [1, 1]} : vector<18x128xf32> to vector<2x128xf32>
    %13 = vector.extract_strided_slice %10 {offsets = [4, 0], sizes = [2, 128], strides = [1, 1]} : vector<18x128xf32> to vector<2x128xf32>
    %14 = arith.maximumf %12, %13 : vector<2x128xf32>
    %15 = vector.extract_strided_slice %10 {offsets = [6, 0], sizes = [2, 128], strides = [1, 1]} : vector<18x128xf32> to vector<2x128xf32>
    %16 = vector.extract_strided_slice %10 {offsets = [12, 0], sizes = [2, 128], strides = [1, 1]} : vector<18x128xf32> to vector<2x128xf32>
    %17 = arith.maximumf %15, %16 : vector<2x128xf32>
    %18 = vector.extract_strided_slice %10 {offsets = [8, 0], sizes = [2, 128], strides = [1, 1]} : vector<18x128xf32> to vector<2x128xf32>
    %19 = vector.extract_strided_slice %10 {offsets = [10, 0], sizes = [2, 128], strides = [1, 1]} : vector<18x128xf32> to vector<2x128xf32>
    %20 = arith.maximumf %18, %19 : vector<2x128xf32>
    %21 = vector.extract_strided_slice %10 {offsets = [14, 0], sizes = [2, 128], strides = [1, 1]} : vector<18x128xf32> to vector<2x128xf32>
    %22 = vector.extract_strided_slice %10 {offsets = [16, 0], sizes = [2, 128], strides = [1, 1]} : vector<18x128xf32> to vector<2x128xf32>
    %23 = arith.maximumf %21, %22 : vector<2x128xf32>
    %24 = arith.maximumf %20, %23 : vector<2x128xf32>
    %25 = tpu.concatenate %11, %14, %17, %24 in 0 : vector<2x128xf32>, vector<2x128xf32>, vector<2x128xf32>, vector<2x128xf32> -> vector<8x128xf32>
    %c0_8 = arith.constant 0 : index
    %c0_9 = arith.constant 0 : index
    %26 = vector.load %arg13[%c0_8, %c0_9] : memref<8x128xf32, #tpu.memory_space<vmem>>, vector<8x128xf32>
    tpu.vector_store %arg13[%c0_8, %c0_9], %25 {strides = array<i32>} : memref<8x128xf32, #tpu.memory_space<vmem>>, vector<8x128xf32>,
    %c0_10 = arith.constant 0 : index
    %c0_11 = arith.constant 0 : index
    %27 = vector.load %arg4[%c0_10, %c0_11] : memref<2x400xf32, #tpu.memory_space<vmem>>, vector<2x400xf32>
    %28 = arith.truncf %27 : vector<2x400xf32> to vector<2x400xbf16>
    %c0_12 = arith.constant 0 : index
    %c0_13 = arith.constant 0 : index
    %29 = vector.load %arg5[%c0_12, %c0_13] : memref<400x300xbf16, #tpu.memory_space<vmem>>, vector<400x300xbf16>
    %cst_14 = arith.constant dense<0.000000e+00> : vector<2x300xf32>
    %30 = tpu.matmul %28, %29, %cst_14 {dimension_numbers = #tpu.dot_dimension_numbers<[1], [0], [0], [1], [0, 0, 1, 1], [], []>} : vector<2x400xbf16>, vector<400x300xbf16>, vector<2x300xf32> -> vector<2x300xf32>
    %c0_15 = arith.constant 0 : index
    %c0_16 = arith.constant 0 : index
    %31 = vector.load %arg6[%c0_15, %c0_16] : memref<1x300xf32, #tpu.memory_space<vmem>>, vector<1x300xf32>
    %32 = vector.broadcast %31 : vector<1x300xf32> to vector<2x300xf32>
    %33 = arith.addf %30, %32 : vector<2x300xf32>
    %cst_17 = arith.constant 0.000000e+00 : f32
    %34 = vector.broadcast %cst_17 : f32 to vector<2x300xf32>
    %35 = arith.maximumf %33, %34 : vector<2x300xf32>
    %36 = arith.truncf %35 : vector<2x300xf32> to vector<2x300xbf16>
    %c0_18 = arith.constant 0 : index
    %c0_19 = arith.constant 0 : index
    %37 = vector.load %arg7[%c0_18, %c0_19] : memref<300x200xbf16, #tpu.memory_space<vmem>>, vector<300x200xbf16>
    %cst_20 = arith.constant dense<0.000000e+00> : vector<2x200xf32>
    %38 = tpu.matmul %36, %37, %cst_20 {dimension_numbers = #tpu.dot_dimension_numbers<[1], [0], [0], [1], [0, 0, 1, 1], [], []>} : vector<2x300xbf16>, vector<300x200xbf16>, vector<2x200xf32> -> vector<2x200xf32>
    %c0_21 = arith.constant 0 : index
    %c0_22 = arith.constant 0 : index
    %39 = vector.load %arg8[%c0_21, %c0_22] : memref<1x200xf32, #tpu.memory_space<vmem>>, vector<1x200xf32>
    %40 = vector.broadcast %39 : vector<1x200xf32> to vector<2x200xf32>
    %41 = arith.addf %38, %40 : vector<2x200xf32>
    %cst_23 = arith.constant 0.000000e+00 : f32
    %42 = vector.broadcast %cst_23 : f32 to vector<2x200xf32>
    %43 = arith.maximumf %41, %42 : vector<2x200xf32>
    %44 = arith.truncf %43 : vector<2x200xf32> to vector<2x200xbf16>
    %c0_24 = arith.constant 0 : index
    %c0_25 = arith.constant 0 : index
    %45 = vector.load %arg9[%c0_24, %c0_25] : memref<200x128xbf16, #tpu.memory_space<vmem>>, vector<200x128xbf16>
    %cst_26 = arith.constant dense<0.000000e+00> : vector<2x128xf32>
    %46 = tpu.matmul %44, %45, %cst_26 {dimension_numbers = #tpu.dot_dimension_numbers<[1], [0], [0], [1], [0, 0, 1, 1], [], []>} : vector<2x200xbf16>, vector<200x128xbf16>, vector<2x128xf32> -> vector<2x128xf32>
    %c0_27 = arith.constant 0 : index
    %c0_28 = arith.constant 0 : index
    %47 = vector.load %arg10[%c0_27, %c0_28] : memref<1x128xf32, #tpu.memory_space<vmem>>, vector<1x128xf32>
    %48 = vector.broadcast %47 : vector<1x128xf32> to vector<2x128xf32>
    %49 = arith.addf %46, %48 : vector<2x128xf32>
    %50 = tpu.iota {dimensions = array<i32: 1>} : vector<2x128xi32>
    %c82_i32 = arith.constant 82 : i32
    %51 = vector.broadcast %c82_i32 : i32 to vector<2x128xi32>
    %52 = arith.cmpi slt, %50, %51 : vector<2x128xi32>
    %cst_29 = arith.constant -1.000000e+30 : f32
    %53 = vector.broadcast %cst_29 : f32 to vector<2x128xf32>
    %54 = arith.select %52, %49, %53 : vector<2x128xi1>, vector<2x128xf32>
    %cst_30 = arith.constant dense<0xFF800000> : vector<2xf32>
    %55 = vector.multi_reduction <maximumf>, %54, %cst_30 [1] : vector<2x128xf32> to vector<2xf32>
    %56 = vector.shape_cast %55 : vector<2xf32> to vector<2x1xf32>
    %57 = vector.broadcast %56 : vector<2x1xf32> to vector<2x128xf32>
    %58 = arith.subf %54, %57 : vector<2x128xf32>
    %59 = math.exp %58 : vector<2x128xf32>
    %cst_31 = arith.constant dense<0.000000e+00> : vector<2xf32>
    %60 = vector.multi_reduction <add>, %59, %cst_31 [1] : vector<2x128xf32> to vector<2xf32>
    %61 = vector.shape_cast %60 : vector<2xf32> to vector<2x1xf32>
    %62 = tpu.reciprocal %61 {approx = true} : vector<2x1xf32> -> vector<2x1xf32>
    %63 = vector.broadcast %62 : vector<2x1xf32> to vector<2x128xf32>
    %64 = arith.mulf %59, %63 : vector<2x128xf32>
    %c0_32 = arith.constant 0 : index
    %c0_33 = arith.constant 0 : index
    %65 = vector.load %arg14[%c0_32, %c0_33] : memref<2x128xf32, #tpu.memory_space<vmem>>, vector<2x128xf32>
    tpu.vector_store %arg14[%c0_32, %c0_33], %64 {strides = array<i32>} : memref<2x128xf32, #tpu.memory_space<vmem>>, vector<2x128xf32>,
    %c0_34 = arith.constant 0 : index
    %c0_35 = arith.constant 0 : index
    %66 = vector.load %arg11[%c0_34, %c0_35] : memref<400x256xbf16, #tpu.memory_space<vmem>>, vector<400x256xbf16>
    %cst_36 = arith.constant dense<0.000000e+00> : vector<2x256xf32>
    %67 = tpu.matmul %28, %66, %cst_36 {dimension_numbers = #tpu.dot_dimension_numbers<[1], [0], [0], [1], [0, 0, 1, 1], [], []>} : vector<2x400xbf16>, vector<400x256xbf16>, vector<2x256xf32> -> vector<2x256xf32>
    %c0_37 = arith.constant 0 : index
    %c0_38 = arith.constant 0 : index
    %68 = vector.load %arg12[%c0_37, %c0_38] : memref<1x256xf32, #tpu.memory_space<vmem>>, vector<1x256xf32>
    %69 = vector.broadcast %68 : vector<1x256xf32> to vector<2x256xf32>
    %70 = arith.addf %67, %69 : vector<2x256xf32>
    %cst_39 = arith.constant 0.000000e+00 : f32
    %71 = vector.broadcast %cst_39 : f32 to vector<2x256xf32>
    %72 = arith.maximumf %70, %71 : vector<2x256xf32>
    %c0_40 = arith.constant 0 : index
    %c0_41 = arith.constant 0 : index
    %73 = vector.load %arg15[%c0_40, %c0_41] : memref<2x256xf32, #tpu.memory_space<vmem>>, vector<2x256xf32>
    tpu.vector_store %arg15[%c0_40, %c0_41], %72 {strides = array<i32>} : memref<2x256xf32, #tpu.memory_space<vmem>>, vector<2x256xf32>,
    return
  }
}

</mosaic_0001>

<llo_original>
// kernel: pvnet_forward.1
$region0: #{pvnet_forward.1}
  #allocation0 [shape = 'u32[]', space=smem, size = 0x4, offset = 0x4, fixed_abs, tag = 'smem constant byte address 0x4 - core index']
  #allocation1 [shape = 'u32[144,128]{1,0:T(1,128)}', space=vmem, size = 0x12000, scoped, tag = 'internal scratch']
  %s0 = inlined_call_operand.vmem [shape: bf16[18,162], index: 0, kind: input, shape index: {}]
  %s1 = inlined_call_operand.vmem [shape: bf16[162,128], index: 1, kind: input, shape index: {}]
  %s2 = inlined_call_operand.vmem [shape: f32[1,128], index: 2, kind: input, shape index: {}]
  %s3 = inlined_call_operand.vmem [shape: f32[1,128], index: 3, kind: input, shape index: {}]
  %s4 = inlined_call_operand.vmem [shape: f32[2,400], index: 4, kind: input, shape index: {}]
  %s5 = inlined_call_operand.vmem [shape: bf16[400,300], index: 5, kind: input, shape index: {}]
  %s6 = inlined_call_operand.vmem [shape: f32[1,300], index: 6, kind: input, shape index: {}]
  %s7 = inlined_call_operand.vmem [shape: bf16[300,200], index: 7, kind: input, shape index: {}]
  %s8 = inlined_call_operand.vmem [shape: f32[1,200], index: 8, kind: input, shape index: {}]
  %s9 = inlined_call_operand.vmem [shape: bf16[200,128], index: 9, kind: input, shape index: {}]
  %s10 = inlined_call_operand.vmem [shape: f32[1,128], index: 10, kind: input, shape index: {}]
  %s11 = inlined_call_operand.vmem [shape: bf16[400,256], index: 11, kind: input, shape index: {}]
  %s12 = inlined_call_operand.vmem [shape: f32[1,256], index: 12, kind: input, shape index: {}]
  %s13 = inlined_call_operand.vmem [shape: f32[8,128], index: 13, kind: output, shape index: {0}]
  %s14 = inlined_call_operand.hbm [shape: f32[2,128], index: 14, kind: output, shape index: {1}]
  %s15 = inlined_call_operand.hbm [shape: f32[2,256], index: 15, kind: output, shape index: {2}]
  %16 = xla_tuple %s13, %s14, %s15
  %s17 = sld [smem:[#allocation0]]
  $region78: #{pvnet_forward.1} parent=0
    _
  %s19 = ssub.s32 1, %s17
  %s20 = scalar_select 0, %s19, %s17
  $region1: #{pvnet_forward.1} parent=0
    #allocation2 [shape = 'u8[1024]{0}', space=vmem, size = 0x400, scoped, tag = 'output window, operand 1, single buffered']
    #allocation3 [shape = 's32[1]{0}', space=sflag, size = 0x4, scoped, tag = 'scoped memory for pvnet_forward.1']
    #allocation4 [shape = 'u8[2048]{0}', space=vmem, size = 0x800, scoped, tag = 'output window, operand 2, single buffered']
    #allocation5 [shape = 's32[1]{0}', space=sflag, size = 0x4, scoped, tag = 'scoped memory for pvnet_forward.1']
    %21 = vsyncpa [#allocation3], 0
    %22 = vsyncpa [#allocation5], 0
    // Predicated region
    $region2: #{pvnet_forward.1} parent=1 // pred_check
      _
    $region3: #{pvnet_forward.1} parent=1 // pred_check_branch
      %24 = sbr.rel (0) target = $region5
    $region4: #{pvnet_forward.1} parent=1 // pred_region
      _
    $region5: #{pvnet_forward.1} parent=1 // pred_fallthru
      _
    // Predicated region
    $region6: #{pvnet_forward.1} parent=1 // pred_check
      _
    $region7: #{pvnet_forward.1} parent=1 // pred_check_branch
      %26 = sbr.rel (0) target = $region9
    $region8: #{pvnet_forward.1} parent=1 // pred_region
      _
    $region9: #{pvnet_forward.1} parent=1 // pred_fallthru
      _
    // Predicated region
    $region10: #{pvnet_forward.1} parent=1 // pred_check
      _
    $region11: #{pvnet_forward.1} parent=1 // pred_check_branch
      %28 = sbr.rel (0) target = $region13
    $region12: #{pvnet_forward.1} parent=1 // pred_region
      _
    $region13: #{pvnet_forward.1} parent=1 // pred_fallthru
      _
    // Predicated region
    $region14: #{pvnet_forward.1} parent=1 // pred_check
      _
    $region15: #{pvnet_forward.1} parent=1 // pred_check_branch
      %30 = sbr.rel (0) target = $region17
    $region16: #{pvnet_forward.1} parent=1 // pred_region
      _
    $region17: #{pvnet_forward.1} parent=1 // pred_fallthru
      _
    // Predicated region
    $region18: #{pvnet_forward.1} parent=1 // pred_check
      _
    $region19: #{pvnet_forward.1} parent=1 // pred_check_branch
      %32 = sbr.rel (0) target = $region21
    $region20: #{pvnet_forward.1} parent=1 // pred_region
      _
    $region21: #{pvnet_forward.1} parent=1 // pred_fallthru
      _
    // Predicated region
    $region22: #{pvnet_forward.1} parent=1 // pred_check
      _
    $region23: #{pvnet_forward.1} parent=1 // pred_check_branch
      %34 = sbr.rel (0) target = $region25
    $region24: #{pvnet_forward.1} parent=1 // pred_region
      _
    $region25: #{pvnet_forward.1} parent=1 // pred_fallthru
      _
    // Predicated region
    $region26: #{pvnet_forward.1} parent=1 // pred_check
      _
    $region27: #{pvnet_forward.1} parent=1 // pred_check_branch
      %36 = sbr.rel (0) target = $region29
    $region28: #{pvnet_forward.1} parent=1 // pred_region
      _
    $region29: #{pvnet_forward.1} parent=1 // pred_fallthru
      _
    // Predicated region
    $region30: #{pvnet_forward.1} parent=1 // pred_check
      _
    $region31: #{pvnet_forward.1} parent=1 // pred_check_branch
      %38 = sbr.rel (0) target = $region33
    $region32: #{pvnet_forward.1} parent=1 // pred_region
      _
    $region33: #{pvnet_forward.1} parent=1 // pred_fallthru
      _
    // Predicated region
    $region34: #{pvnet_forward.1} parent=1 // pred_check
      _
    $region35: #{pvnet_forward.1} parent=1 // pred_check_branch
      %40 = sbr.rel (0) target = $region37
    $region36: #{pvnet_forward.1} parent=1 // pred_region
      _
    $region37: #{pvnet_forward.1} parent=1 // pred_fallthru
      _
    // Predicated region
    $region38: #{pvnet_forward.1} parent=1 // pred_check
      _
    $region39: #{pvnet_forward.1} parent=1 // pred_check_branch
      %42 = sbr.rel (0) target = $region41
    $region40: #{pvnet_forward.1} parent=1 // pred_region
      _
    $region41: #{pvnet_forward.1} parent=1 // pred_fallthru
      _
    // Predicated region
    $region42: #{pvnet_forward.1} parent=1 // pred_check
      _
    $region43: #{pvnet_forward.1} parent=1 // pred_check_branch
      %44 = sbr.rel (0) target = $region45
    $region44: #{pvnet_forward.1} parent=1 // pred_region
      _
    $region45: #{pvnet_forward.1} parent=1 // pred_fallthru
      _
    // Predicated region
    $region46: #{pvnet_forward.1} parent=1 // pred_check
      _
    $region47: #{pvnet_forward.1} parent=1 // pred_check_branch
      %46 = sbr.rel (0) target = $region49
    $region48: #{pvnet_forward.1} parent=1 // pred_region
      _
    $region49: #{pvnet_forward.1} parent=1 // pred_fallthru
      _
    // Predicated region
    $region50: #{pvnet_forward.1} parent=1 // pred_check
      _
    $region51: #{pvnet_forward.1} parent=1 // pred_check_branch
      %48 = sbr.rel (0) target = $region53
    $region52: #{pvnet_forward.1} parent=1 // pred_region
      _
    $region53: #{pvnet_forward.1} parent=1 // pred_fallthru
      _
    %v50 = vld [vmem:[%s0] sm:$0xff]
    %v51 = vld [vmem:[%s0 + $0x8] sm:$0xff]
    %v52 = vld [vmem:[%s0 + $0x10] sm:$0x11]
    %v53 = vld [vmem:[%s1] sm:$0xf]
    %v54 = vld [vmem:[%s1 + $0x4] sm:$0xf]
    %v55 = vld [vmem:[%s1 + $0x8] sm:$0xf]
    %v56 = vld [vmem:[%s1 + $0xc] sm:$0xf]
    %v57 = vld [vmem:[%s1 + $0x10] sm:$0xf]
    %v58 = vld [vmem:[%s1 + $0x14] sm:$0xf]
    %v59 = vld [vmem:[%s1 + $0x18] sm:$0xf]
    %v60 = vld [vmem:[%s1 + $0x1c] sm:$0xf]
    %v61 = vld [vmem:[%s1 + $0x20] sm:$0xf]
    %v62 = vld [vmem:[%s1 + $0x24] sm:$0xf]
    %v63 = vld [vmem:[%s1 + $0x28] sm:$0xf]
    %v64 = vld [vmem:[%s1 + $0x2c] sm:$0xf]
    %v65 = vld [vmem:[%s1 + $0x30] sm:$0xf]
    %v66 = vld [vmem:[%s1 + $0x34] sm:$0xf]
    %v67 = vld [vmem:[%s1 + $0x38] sm:$0xf]
    %v68 = vld [vmem:[%s1 + $0x3c] sm:$0xf]
    %v69 = vld [vmem:[%s1 + $0x40] sm:$0xf]
    %v70 = vld [vmem:[%s1 + $0x44] sm:$0xf]
    %v71 = vld [vmem:[%s1 + $0x48] sm:$0xf]
    %v72 = vld [vmem:[%s1 + $0x4c] sm:$0xf]
    %v73 = vld [vmem:[%s1 + $0x50] sm:$0x1]
    %v77 = vunpack.c.l.b16 %v50
    %v78 = vunpack.c.h.b16 %v50
    %v79 = vunpack.c.l.b16 %v51
    %v80 = vunpack.c.h.b16 %v51
    %v81 = vunpack.c.l.b16 %v52
    %v82 = vunpack.c.h.b16 %v52
    %v83 = vpack.c.b16 %v79, %v77
    %v84 = vpack.c.b16 %v80, %v78
    %v85 = vpack.c.b16 %v81, %v81
    %v86 = vpack.c.b16 %v82, %v82
    %v110 = vunpack.c.l.b16 %v53
    %v111 = vunpack.c.l.b16 %v54
    %v112 = vunpack.c.l.b16 %v55
    %v113 = vunpack.c.l.b16 %v56
    %v114 = vunpack.c.l.b16 %v57
    %v115 = vunpack.c.l.b16 %v58
    %v116 = vunpack.c.l.b16 %v59
    %v117 = vunpack.c.l.b16 %v60
    %v118 = vunpack.c.l.b16 %v61
    %v119 = vunpack.c.l.b16 %v62
    %v120 = vunpack.c.l.b16 %v63
    %v121 = vunpack.c.l.b16 %v64
    %v122 = vunpack.c.l.b16 %v65
    %v123 = vunpack.c.l.b16 %v66
    %v124 = vunpack.c.l.b16 %v67
    %v125 = vunpack.c.l.b16 %v68
    %v126 = vunpack.c.l.b16 %v69
    %v127 = vunpack.c.l.b16 %v70
    %v128 = vunpack.c.l.b16 %v71
    %v129 = vunpack.c.l.b16 %v72
    %v130 = vunpack.c.l.b16 %v73
    %v131 = vpack.c.b16 %v111, %v110
    %v132 = vpack.c.b16 %v113, %v112
    %v133 = vpack.c.b16 %v115, %v114
    %v134 = vpack.c.b16 %v117, %v116
    %v135 = vpack.c.b16 %v119, %v118
    %v136 = vpack.c.b16 %v121, %v120
    %v137 = vpack.c.b16 %v123, %v122
    %v138 = vpack.c.b16 %v125, %v124
    %v139 = vpack.c.b16 %v127, %v126
    %v140 = vpack.c.b16 %v129, %v128
    %v141 = vpack.c.b16 %v130, %v130
    %vm152 = vcmask 277504
    %v154 = vsel %vm152, %v84, 0
    %v157 = vsel %vm152, %v86, 0
    %vm159 = vcmask 1040384
    %v161 = vsel %vm159, %v141, 0
    %163 = vmatprep.subr.bf16.mxu0 0
    %164 = vmatpush1.bf16.msra.mxu0 %v131
    %165 = vmatprep.subr.bf16.mxu0 0
    %166 = vmatpush1.bf16.msra.mxu0 %v132
    %167 = vmatprep.subr.bf16.mxu0 0
    %168 = vmatpush1.bf16.msra.mxu0 %v133
    %169 = vmatprep.subr.bf16.mxu0 0
    %170 = vmatpush1.bf16.msra.mxu0 %v134
    %171 = vmatprep.subr.bf16.mxu0 0
    %172 = vmatpush1.bf16.msra.mxu0 %v135
    %173 = vmatprep.subr.bf16.mxu0 0
    %174 = vmatpush1.bf16.msra.mxu0 %v136
    %175 = vmatprep.subr.bf16.mxu0 0
    %176 = vmatpush1.bf16.msra.mxu0 %v137
    %177 = vmatprep.subr.bf16.mxu0 0
    %178 = vmatpush1.bf16.msra.mxu0 %v138
    %179 = vmatprep.subr.bf16.mxu0 0
    %180 = vmatpush1.bf16.msra.mxu0 %v139
    %181 = vmatprep.subr.bf16.mxu0 0
    %182 = vmatpush1.bf16.msra.mxu0 %v140
    %183 = vmatprep.subr.bf16.mxu0 0
    %184 = vmatpush1.bf16.msra.mxu0 %v161
    %185 = vmatprep.subr.bf16.mxu0 0
    %186 = vmatpush1.bf16.msra.mxu0 0
    %187 = vmatprep.subr.bf16.mxu0 0
    %188 = vmatpush1.bf16.msra.mxu0 0
    %189 = vmatprep.subr.bf16.mxu0 0
    %190 = vmatpush1.bf16.msra.mxu0 0
    %191 = vmatprep.subr.bf16.mxu0 0
    %192 = vmatpush1.bf16.msra.mxu0 0
    %193 = vmatprep.subr.bf16.mxu0 0
    %194 = vmatpush1.bf16.msra.mxu0 0
    %195 = vmatprep.mubr.bf16.mxu0 %v154
    %196 = vmatmul.mubr.bf16.gmra.mrb[0].mxu0 %v83
    %v197 = vpop.f32.mrb[0].mxu0
    %v198 = vadd.f32 0.0, %v197
    %v199 = vpop.f32.mrb[0].mxu0
    %v200 = vpop.f32.mrb[0].mxu0
    %v201 = vadd.f32 0.0, %v200
    %v202 = vpop.f32.mrb[0].mxu0
    %203 = vmatprep.mubr.bf16.mxu0 %v157
    %204 = vmatmul.mubr.bf16.gmra.mrb[0].mxu0 %v85
    %v205 = vpop.f32.mrb[0].mxu0
    %v206 = vadd.f32 0.0, %v205
    %v207 = vpop.f32.mrb[0].mxu0
    %v208 = vpop.f32.mrb[0].mxu0
    %v209 = vpop.f32.mrb[0].mxu0
    %210 = vdwg.mxu0
    %v211 = vld [vmem:[%s2] sm:$0x1]
    %v213 = vlaneseq
    %v214 = vshrl.u32 %v213, 7
    %v215 = vsub.s32 0, %v214
    %v216 = vrot.slane %v211, %v215
    %v218 = vmul.f32 %v198, %v216
    %v219 = vmul.f32 %v201, %v216
    %v220 = vmul.f32 %v206, %v216
    %v221 = vld [vmem:[%s3] sm:$0x1]
    %v223 = vlaneseq
    %v224 = vshrl.u32 %v223, 7
    %v225 = vsub.s32 0, %v224
    %v226 = vrot.slane %v221, %v225
    %v228 = vadd.f32 %v218, %v226
    %v229 = vadd.f32 %v219, %v226
    %v230 = vadd.f32 %v220, %v226
    %v231 = vmax.f32 %v228, 0.0
    %v232 = vmax.f32 %v229, 0.0
    %v233 = vmax.f32 %v230, 0.0
    %v235 = vrot.slane %v231, 2
    %v237 = vmax.f32 %v231, %v235
    %v239 = vrot.slane %v232, 6
    %v241 = vmax.f32 %v231, %v239
    %v242 = vrot.slane %v232, 2
    %v244 = vmax.f32 %v232, %v242
    %v246 = vrot.slane %v233, 2
    %v248 = vmax.f32 %v232, %v246
    %v250 = vrot.slane %v248, 6
    %v252 = vmax.f32 %v244, %v250
    %v254 = vrot.slane %v241, 2
    %v257 = vrot.slane %v252, 2
    %vm259 = vcmask 1041408
    %v260 = vsel %vm259, %v231, %v237
    %vm261 = vcmask 1043456
    %v262 = vsel %vm261, %v260, %v254
    %vm263 = vcmask 1045504
    %v264 = vsel %vm263, %v262, %v257
    %265 = vst [vmem:[%s13] sm:$0xff] %v264
    %v266 = vld [vmem:[%s4] sm:$0xff]
    %v268 = vcombine.high %v266, %v266
    %v270 = vunpack.c.l.s4 1983009808
    %v271 = vunpack.c.0.s8 %v270
    %v272 = vlaneseq
    %v273 = vshrl.u32 %v272, 7
    %v274 = vsub.s32 %v271, %v273
    %v275 = vrot.slane %v266, %v274
    %v277 = vunpack.c.l.s4 1983009808
    %v278 = vunpack.c.0.s8 %v277
    %v279 = vlaneseq
    %v280 = vshrl.u32 %v279, 7
    %v281 = vsub.s32 %v278, %v280
    %v282 = vrot.slane %v268, %v281
    %v283 = vcombine.high %v275, %v275
    %v284 = vcombine.high %v282, %v282
    %v289 = vpack.c.bf16 %v275, %v275
    %v290 = vpack.c.bf16 %v283, %v283
    %v291 = vpack.c.bf16 %v282, %v282
    %v292 = vpack.c.bf16 %v284, %v284
    %v293 = vld [vmem:[%s5] sm:$0xff]
    %v294 = vld [vmem:[%s5 + $0x8] sm:$0xf]
    %v295 = vld [vmem:[%s5 + $0xc] sm:$0xff]
    %v296 = vld [vmem:[%s5 + $0x14] sm:$0xf]
    %v297 = vld [vmem:[%s5 + $0x18] sm:$0xff]
    %v298 = vld [vmem:[%s5 + $0x20] sm:$0xf]
    %v299 = vld [vmem:[%s5 + $0x24] sm:$0xff]
    %v300 = vld [vmem:[%s5 + $0x2c] sm:$0xf]
    %v301 = vld [vmem:[%s5 + $0x30] sm:$0xff]
    %v302 = vld [vmem:[%s5 + $0x38] sm:$0xf]
    %v303 = vld [vmem:[%s5 + $0x3c] sm:$0xff]
    %v304 = vld [vmem:[%s5 + $0x44] sm:$0xf]
    %v305 = vld [vmem:[%s5 + $0x48] sm:$0xff]
    %v306 = vld [vmem:[%s5 + $0x50] sm:$0xf]
    %v307 = vld [vmem:[%s5 + $0x54] sm:$0xff]
    %v308 = vld [vmem:[%s5 + $0x5c] sm:$0xf]
    %v309 = vld [vmem:[%s5 + $0x60] sm:$0xff]
    %v310 = vld [vmem:[%s5 + $0x68] sm:$0xf]
    %v311 = vld [vmem:[%s5 + $0x6c] sm:$0xff]
    %v312 = vld [vmem:[%s5 + $0x74] sm:$0xf]
    %v313 = vld [vmem:[%s5 + $0x78] sm:$0xff]
    %v314 = vld [vmem:[%s5 + $0x80] sm:$0xf]
    %v315 = vld [vmem:[%s5 + $0x84] sm:$0xff]
    %v316 = vld [vmem:[%s5 + $0x8c] sm:$0xf]
    %v317 = vld [vmem:[%s5 + $0x90] sm:$0xff]
    %v318 = vld [vmem:[%s5 + $0x98] sm:$0xf]
    %v319 = vld [vmem:[%s5 + $0x9c] sm:$0xff]
    %v320 = vld [vmem:[%s5 + $0xa4] sm:$0xf]
    %v321 = vld [vmem:[%s5 + $0xa8] sm:$0xff]
    %v322 = vld [vmem:[%s5 + $0xb0] sm:$0xf]
    %v323 = vld [vmem:[%s5 + $0xb4] sm:$0xff]
    %v324 = vld [vmem:[%s5 + $0xbc] sm:$0xf]
    %v325 = vld [vmem:[%s5 + $0xc0] sm:$0xff]
    %v326 = vld [vmem:[%s5 + $0xc8] sm:$0xf]
    %v327 = vld [vmem:[%s5 + $0xcc] sm:$0xff]
    %v328 = vld [vmem:[%s5 + $0xd4] sm:$0xf]
    %v329 = vld [vmem:[%s5 + $0xd8] sm:$0xff]
    %v330 = vld [vmem:[%s5 + $0xe0] sm:$0xf]
    %v331 = vld [vmem:[%s5 + $0xe4] sm:$0xff]
    %v332 = vld [vmem:[%s5 + $0xec] sm:$0xf]
    %v333 = vld [vmem:[%s5 + $0xf0] sm:$0xff]
    %v334 = vld [vmem:[%s5 + $0xf8] sm:$0xf]
    %v335 = vld [vmem:[%s5 + $0xfc] sm:$0xff]
    %v336 = vld [vmem:[%s5 + $0x104] sm:$0xf]
    %v337 = vld [vmem:[%s5 + $0x108] sm:$0xff]
    %v338 = vld [vmem:[%s5 + $0x110] sm:$0xf]
    %v339 = vld [vmem:[%s5 + $0x114] sm:$0xff]
    %v340 = vld [vmem:[%s5 + $0x11c] sm:$0xf]
    %v341 = vld [vmem:[%s5 + $0x120] sm:$0xff]
    %v342 = vld [vmem:[%s5 + $0x128] sm:$0xf]
    %v343 = vld [vmem:[%s5 + $0x12c] sm:$0xff]
    %v344 = vld [vmem:[%s5 + $0x134] sm:$0xf]
    %v345 = vld [vmem:[%s5 + $0x138] sm:$0xff]
    %v346 = vld [vmem:[%s5 + $0x140] sm:$0xf]
    %v347 = vld [vmem:[%s5 + $0x144] sm:$0xff]
    %v348 = vld [vmem:[%s5 + $0x14c] sm:$0xf]
    %v349 = vld [vmem:[%s5 + $0x150] sm:$0xff]
    %v350 = vld [vmem:[%s5 + $0x158] sm:$0xf]
    %v351 = vld [vmem:[%s5 + $0x15c] sm:$0xff]
    %v352 = vld [vmem:[%s5 + $0x164] sm:$0xf]
    %v353 = vld [vmem:[%s5 + $0x168] sm:$0xff]
    %v354 = vld [vmem:[%s5 + $0x170] sm:$0xf]
    %v355 = vld [vmem:[%s5 + $0x174] sm:$0xff]
    %v356 = vld [vmem:[%s5 + $0x17c] sm:$0xf]
    %v357 = vld [vmem:[%s5 + $0x180] sm:$0xff]
    %v358 = vld [vmem:[%s5 + $0x188] sm:$0xf]
    %v359 = vld [vmem:[%s5 + $0x18c] sm:$0xff]
    %v360 = vld [vmem:[%s5 + $0x194] sm:$0xf]
    %v361 = vld [vmem:[%s5 + $0x198] sm:$0xff]
    %v362 = vld [vmem:[%s5 + $0x1a0] sm:$0xf]
    %v363 = vld [vmem:[%s5 + $0x1a4] sm:$0xff]
    %v364 = vld [vmem:[%s5 + $0x1ac] sm:$0xf]
    %v365 = vld [vmem:[%s5 + $0x1b0] sm:$0xff]
    %v366 = vld [vmem:[%s5 + $0x1b8] sm:$0xf]
    %v367 = vld [vmem:[%s5 + $0x1bc] sm:$0xff]
    %v368 = vld [vmem:[%s5 + $0x1c4] sm:$0xf]
    %v369 = vld [vmem:[%s5 + $0x1c8] sm:$0xff]
    %v370 = vld [vmem:[%s5 + $0x1d0] sm:$0xf]
    %v371 = vld [vmem:[%s5 + $0x1d4] sm:$0xff]
    %v372 = vld [vmem:[%s5 + $0x1dc] sm:$0xf]
    %v373 = vld [vmem:[%s5 + $0x1e0] sm:$0xff]
    %v374 = vld [vmem:[%s5 + $0x1e8] sm:$0xf]
    %v375 = vld [vmem:[%s5 + $0x1ec] sm:$0xff]
    %v376 = vld [vmem:[%s5 + $0x1f4] sm:$0xf]
    %v377 = vld [vmem:[%s5 + $0x1f8] sm:$0xff]
    %v378 = vld [vmem:[%s5 + $0x200] sm:$0xf]
    %v379 = vld [vmem:[%s5 + $0x204] sm:$0xff]
    %v380 = vld [vmem:[%s5 + $0x20c] sm:$0xf]
    %v381 = vld [vmem:[%s5 + $0x210] sm:$0xff]
    %v382 = vld [vmem:[%s5 + $0x218] sm:$0xf]
    %v383 = vld [vmem:[%s5 + $0x21c] sm:$0xff]
    %v384 = vld [vmem:[%s5 + $0x224] sm:$0xf]
    %v385 = vld [vmem:[%s5 + $0x228] sm:$0xff]
    %v386 = vld [vmem:[%s5 + $0x230] sm:$0xf]
    %v387 = vld [vmem:[%s5 + $0x234] sm:$0xff]
    %v388 = vld [vmem:[%s5 + $0x23c] sm:$0xf]
    %v389 = vld [vmem:[%s5 + $0x240] sm:$0xff]
    %v390 = vld [vmem:[%s5 + $0x248] sm:$0xf]
    %v391 = vld [vmem:[%s5 + $0x24c] sm:$0xff]
    %v392 = vld [vmem:[%s5 + $0x254] sm:$0xf]
    %v393 = vld [vmem:[%s6] sm:$0x7]
    %v395 = vlaneseq
    %v396 = vshrl.u32 %v395, 7
    %v397 = vsub.s32 0, %v396
    %v398 = vrot.slane %v393, %v397
    %v399 = vlaneseq
    %v400 = vshrl.u32 %v399, 7
    %v401 = vsub.s32 1, %v400
    %v402 = vrot.slane %v393, %v401
    %v403 = vlaneseq
    %v404 = vshrl.u32 %v403, 7
    %v405 = vsub.s32 2, %v404
    %v406 = vrot.slane %v393, %v405
    %v510 = vunpack.c.l.b16 %v293
    %v511 = vunpack.c.h.b16 %v293
    %v512 = vunpack.c.l.b16 %v294
    %v513 = vunpack.c.l.b16 %v295
    %v514 = vunpack.c.h.b16 %v295
    %v515 = vunpack.c.l.b16 %v296
    %v516 = vunpack.c.l.b16 %v297
    %v517 = vunpack.c.h.b16 %v297
    %v518 = vunpack.c.l.b16 %v298
    %v519 = vunpack.c.l.b16 %v299
    %v520 = vunpack.c.h.b16 %v299
    %v521 = vunpack.c.l.b16 %v300
    %v522 = vunpack.c.l.b16 %v301
    %v523 = vunpack.c.h.b16 %v301
    %v524 = vunpack.c.l.b16 %v302
    %v525 = vunpack.c.l.b16 %v303
    %v526 = vunpack.c.h.b16 %v303
    %v527 = vunpack.c.l.b16 %v304
    %v528 = vunpack.c.l.b16 %v305
    %v529 = vunpack.c.h.b16 %v305
    %v530 = vunpack.c.l.b16 %v306
    %v531 = vunpack.c.l.b16 %v307
    %v532 = vunpack.c.h.b16 %v307
    %v533 = vunpack.c.l.b16 %v308
    %v534 = vunpack.c.l.b16 %v309
    %v535 = vunpack.c.h.b16 %v309
    %v536 = vunpack.c.l.b16 %v310
    %v537 = vunpack.c.l.b16 %v311
    %v538 = vunpack.c.h.b16 %v311
    %v539 = vunpack.c.l.b16 %v312
    %v540 = vunpack.c.l.b16 %v313
    %v541 = vunpack.c.h.b16 %v313
    %v542 = vunpack.c.l.b16 %v314
    %v543 = vunpack.c.l.b16 %v315
    %v544 = vunpack.c.h.b16 %v315
    %v545 = vunpack.c.l.b16 %v316
    %v546 = vunpack.c.l.b16 %v317
    %v547 = vunpack.c.h.b16 %v317
    %v548 = vunpack.c.l.b16 %v318
    %v549 = vunpack.c.l.b16 %v319
    %v550 = vunpack.c.h.b16 %v319
    %v551 = vunpack.c.l.b16 %v320
    %v552 = vunpack.c.l.b16 %v321
    %v553 = vunpack.c.h.b16 %v321
    %v554 = vunpack.c.l.b16 %v322
    %v555 = vunpack.c.l.b16 %v323
    %v556 = vunpack.c.h.b16 %v323
    %v557 = vunpack.c.l.b16 %v324
    %v558 = vunpack.c.l.b16 %v325
    %v559 = vunpack.c.h.b16 %v325
    %v560 = vunpack.c.l.b16 %v326
    %v561 = vunpack.c.l.b16 %v327
    %v562 = vunpack.c.h.b16 %v327
    %v563 = vunpack.c.l.b16 %v328
    %v564 = vunpack.c.l.b16 %v329
    %v565 = vunpack.c.h.b16 %v329
    %v566 = vunpack.c.l.b16 %v330
    %v567 = vunpack.c.l.b16 %v331
    %v568 = vunpack.c.h.b16 %v331
    %v569 = vunpack.c.l.b16 %v332
    %v570 = vunpack.c.l.b16 %v333
    %v571 = vunpack.c.h.b16 %v333
    %v572 = vunpack.c.l.b16 %v334
    %v573 = vunpack.c.l.b16 %v335
    %v574 = vunpack.c.h.b16 %v335
    %v575 = vunpack.c.l.b16 %v336
    %v576 = vunpack.c.l.b16 %v337
    %v577 = vunpack.c.h.b16 %v337
    %v578 = vunpack.c.l.b16 %v338
    %v579 = vunpack.c.l.b16 %v339
    %v580 = vunpack.c.h.b16 %v339
    %v581 = vunpack.c.l.b16 %v340
    %v582 = vunpack.c.l.b16 %v341
    %v583 = vunpack.c.h.b16 %v341
    %v584 = vunpack.c.l.b16 %v342
    %v585 = vunpack.c.l.b16 %v343
    %v586 = vunpack.c.h.b16 %v343
    %v587 = vunpack.c.l.b16 %v344
    %v588 = vunpack.c.l.b16 %v345
    %v589 = vunpack.c.h.b16 %v345
    %v590 = vunpack.c.l.b16 %v346
    %v591 = vunpack.c.l.b16 %v347
    %v592 = vunpack.c.h.b16 %v347
    %v593 = vunpack.c.l.b16 %v348
    %v594 = vunpack.c.l.b16 %v349
    %v595 = vunpack.c.h.b16 %v349
    %v596 = vunpack.c.l.b16 %v350
    %v597 = vunpack.c.l.b16 %v351
    %v598 = vunpack.c.h.b16 %v351
    %v599 = vunpack.c.l.b16 %v352
    %v600 = vunpack.c.l.b16 %v353
    %v601 = vunpack.c.h.b16 %v353
    %v602 = vunpack.c.l.b16 %v354
    %v603 = vunpack.c.l.b16 %v355
    %v604 = vunpack.c.h.b16 %v355
    %v605 = vunpack.c.l.b16 %v356
    %v606 = vunpack.c.l.b16 %v357
    %v607 = vunpack.c.h.b16 %v357
    %v608 = vunpack.c.l.b16 %v358
    %v609 = vunpack.c.l.b16 %v359
    %v610 = vunpack.c.h.b16 %v359
    %v611 = vunpack.c.l.b16 %v360
    %v612 = vunpack.c.l.b16 %v361
    %v613 = vunpack.c.h.b16 %v361
    %v614 = vunpack.c.l.b16 %v362
    %v615 = vunpack.c.l.b16 %v363
    %v616 = vunpack.c.h.b16 %v363
    %v617 = vunpack.c.l.b16 %v364
    %v618 = vunpack.c.l.b16 %v365
    %v619 = vunpack.c.h.b16 %v365
    %v620 = vunpack.c.l.b16 %v366
    %v621 = vunpack.c.l.b16 %v367
    %v622 = vunpack.c.h.b16 %v367
    %v623 = vunpack.c.l.b16 %v368
    %v624 = vunpack.c.l.b16 %v369
    %v625 = vunpack.c.h.b16 %v369
    %v626 = vunpack.c.l.b16 %v370
    %v627 = vunpack.c.l.b16 %v371
    %v628 = vunpack.c.h.b16 %v371
    %v629 = vunpack.c.l.b16 %v372
    %v630 = vunpack.c.l.b16 %v373
    %v631 = vunpack.c.h.b16 %v373
    %v632 = vunpack.c.l.b16 %v374
    %v633 = vunpack.c.l.b16 %v375
    %v634 = vunpack.c.h.b16 %v375
    %v635 = vunpack.c.l.b16 %v376
    %v636 = vunpack.c.l.b16 %v377
    %v637 = vunpack.c.h.b16 %v377
    %v638 = vunpack.c.l.b16 %v378
    %v639 = vunpack.c.l.b16 %v379
    %v640 = vunpack.c.h.b16 %v379
    %v641 = vunpack.c.l.b16 %v380
    %v642 = vunpack.c.l.b16 %v381
    %v643 = vunpack.c.h.b16 %v381
    %v644 = vunpack.c.l.b16 %v382
    %v645 = vunpack.c.l.b16 %v383
    %v646 = vunpack.c.h.b16 %v383
    %v647 = vunpack.c.l.b16 %v384
    %v648 = vunpack.c.l.b16 %v385
    %v649 = vunpack.c.h.b16 %v385
    %v650 = vunpack.c.l.b16 %v386
    %v651 = vunpack.c.l.b16 %v387
    %v652 = vunpack.c.h.b16 %v387
    %v653 = vunpack.c.l.b16 %v388
    %v654 = vunpack.c.l.b16 %v389
    %v655 = vunpack.c.h.b16 %v389
    %v656 = vunpack.c.l.b16 %v390
    %v657 = vunpack.c.l.b16 %v391
    %v658 = vunpack.c.h.b16 %v391
    %v659 = vunpack.c.l.b16 %v392
    %v660 = vpack.c.b16 %v513, %v510
    %v661 = vpack.c.b16 %v514, %v511
    %v662 = vpack.c.b16 %v515, %v512
    %v663 = vpack.c.b16 %v519, %v516
    %v664 = vpack.c.b16 %v520, %v517
    %v665 = vpack.c.b16 %v521, %v518
    %v666 = vpack.c.b16 %v525, %v522
    %v667 = vpack.c.b16 %v526, %v523
    %v668 = vpack.c.b16 %v527, %v524
    %v669 = vpack.c.b16 %v531, %v528
    %v670 = vpack.c.b16 %v532, %v529
    %v671 = vpack.c.b16 %v533, %v530
    %v672 = vpack.c.b16 %v537, %v534
    %v673 = vpack.c.b16 %v538, %v535
    %v674 = vpack.c.b16 %v539, %v536
    %v675 = vpack.c.b16 %v543, %v540
    %v676 = vpack.c.b16 %v544, %v541
    %v677 = vpack.c.b16 %v545, %v542
    %v678 = vpack.c.b16 %v549, %v546
    %v679 = vpack.c.b16 %v550, %v547
    %v680 = vpack.c.b16 %v551, %v548
    %v681 = vpack.c.b16 %v555, %v552
    %v682 = vpack.c.b16 %v556, %v553
    %v683 = vpack.c.b16 %v557, %v554
    %v684 = vpack.c.b16 %v561, %v558
    %v685 = vpack.c.b16 %v562, %v559
    %v686 = vpack.c.b16 %v563, %v560
    %v687 = vpack.c.b16 %v567, %v564
    %v688 = vpack.c.b16 %v568, %v565
    %v689 = vpack.c.b16 %v569, %v566
    %v690 = vpack.c.b16 %v573, %v570
    %v691 = vpack.c.b16 %v574, %v571
    %v692 = vpack.c.b16 %v575, %v572
    %v693 = vpack.c.b16 %v579, %v576
    %v694 = vpack.c.b16 %v580, %v577
    %v695 = vpack.c.b16 %v581, %v578
    %v696 = vpack.c.b16 %v585, %v582
    %v697 = vpack.c.b16 %v586, %v583
    %v698 = vpack.c.b16 %v587, %v584
    %v699 = vpack.c.b16 %v591, %v588
    %v700 = vpack.c.b16 %v592, %v589
    %v701 = vpack.c.b16 %v593, %v590
    %v702 = vpack.c.b16 %v597, %v594
    %v703 = vpack.c.b16 %v598, %v595
    %v704 = vpack.c.b16 %v599, %v596
    %v705 = vpack.c.b16 %v603, %v600
    %v706 = vpack.c.b16 %v604, %v601
    %v707 = vpack.c.b16 %v605, %v602
    %v708 = vpack.c.b16 %v609, %v606
    %v709 = vpack.c.b16 %v610, %v607
    %v710 = vpack.c.b16 %v611, %v608
    %v711 = vpack.c.b16 %v615, %v612
    %v712 = vpack.c.b16 %v616, %v613
    %v713 = vpack.c.b16 %v617, %v614
    %v714 = vpack.c.b16 %v621, %v618
    %v715 = vpack.c.b16 %v622, %v619
    %v716 = vpack.c.b16 %v623, %v620
    %v717 = vpack.c.b16 %v627, %v624
    %v718 = vpack.c.b16 %v628, %v625
    %v719 = vpack.c.b16 %v629, %v626
    %v720 = vpack.c.b16 %v633, %v630
    %v721 = vpack.c.b16 %v634, %v631
    %v722 = vpack.c.b16 %v635, %v632
    %v723 = vpack.c.b16 %v639, %v636
    %v724 = vpack.c.b16 %v640, %v637
    %v725 = vpack.c.b16 %v641, %v638
    %v726 = vpack.c.b16 %v645, %v642
    %v727 = vpack.c.b16 %v646, %v643
    %v728 = vpack.c.b16 %v647, %v644
    %v729 = vpack.c.b16 %v651, %v648
    %v730 = vpack.c.b16 %v652, %v649
    %v731 = vpack.c.b16 %v653, %v650
    %v732 = vpack.c.b16 %v657, %v654
    %v733 = vpack.c.b16 %v658, %v655
    %v734 = vpack.c.b16 %v659, %v656
    %vm810 = vcmask 130048
    %v812 = vsel %vm810, %v292, 0
    %814 = vmatprep.subr.bf16.mxu0 %v661
    %815 = vmatpush1.bf16.msra.mxu0 %v660
    %816 = vmatprep.subr.bf16.mxu0 %v664
    %817 = vmatpush1.bf16.msra.mxu0 %v663
    %818 = vmatprep.subr.bf16.mxu0 %v667
    %819 = vmatpush1.bf16.msra.mxu0 %v666
    %820 = vmatprep.subr.bf16.mxu0 %v670
    %821 = vmatpush1.bf16.msra.mxu0 %v669
    %822 = vmatprep.subr.bf16.mxu0 %v673
    %823 = vmatpush1.bf16.msra.mxu0 %v672
    %824 = vmatprep.subr.bf16.mxu0 %v676
    %825 = vmatpush1.bf16.msra.mxu0 %v675
    %826 = vmatprep.subr.bf16.mxu0 %v679
    %827 = vmatpush1.bf16.msra.mxu0 %v678
    %828 = vmatprep.subr.bf16.mxu0 %v682
    %829 = vmatpush1.bf16.msra.mxu0 %v681
    %830 = vmatprep.subr.bf16.mxu0 %v685
    %831 = vmatpush1.bf16.msra.mxu0 %v684
    %832 = vmatprep.subr.bf16.mxu0 %v688
    %833 = vmatpush1.bf16.msra.mxu0 %v687
    %834 = vmatprep.subr.bf16.mxu0 %v691
    %835 = vmatpush1.bf16.msra.mxu0 %v690
    %836 = vmatprep.subr.bf16.mxu0 %v694
    %837 = vmatpush1.bf16.msra.mxu0 %v693
    %838 = vmatprep.subr.bf16.mxu0 %v697
    %839 = vmatpush1.bf16.msra.mxu0 %v696
    %840 = vmatprep.subr.bf16.mxu0 %v700
    %841 = vmatpush1.bf16.msra.mxu0 %v699
    %842 = vmatprep.subr.bf16.mxu0 %v703
    %843 = vmatpush1.bf16.msra.mxu0 %v702
    %844 = vmatprep.subr.bf16.mxu0 %v706
    %845 = vmatpush1.bf16.msra.mxu0 %v705
    %846 = vmatprep.mubr.bf16.mxu0 %v290
    %847 = vmatmul.mubr.bf16.gmra.mrb[0].mxu0 %v289
    %v848 = vpop.f32.mrb[0].mxu0
    %v849 = vadd.f32 %v398, %v848
    %v850 = vpop.f32.mrb[0].mxu0
    %v851 = vadd.f32 %v402, %v850
    %v852 = vpop.f32.mrb[0].mxu0
    %v853 = vpop.f32.mrb[0].mxu0
    %854 = vdwg.mxu0
    %855 = vmatprep.subr.bf16.mxu0 %v709
    %856 = vmatpush1.bf16.msra.mxu0 %v708
    %857 = vmatprep.subr.bf16.mxu0 %v712
    %858 = vmatpush1.bf16.msra.mxu0 %v711
    %859 = vmatprep.subr.bf16.mxu0 %v715
    %860 = vmatpush1.bf16.msra.mxu0 %v714
    %861 = vmatprep.subr.bf16.mxu0 %v718
    %862 = vmatpush1.bf16.msra.mxu0 %v717
    %863 = vmatprep.subr.bf16.mxu0 %v721
    %864 = vmatpush1.bf16.msra.mxu0 %v720
    %865 = vmatprep.subr.bf16.mxu0 %v724
    %866 = vmatpush1.bf16.msra.mxu0 %v723
    %867 = vmatprep.subr.bf16.mxu0 %v727
    %868 = vmatpush1.bf16.msra.mxu0 %v726
    %869 = vmatprep.subr.bf16.mxu0 %v730
    %870 = vmatpush1.bf16.msra.mxu0 %v729
    %871 = vmatprep.subr.bf16.mxu0 %v733
    %872 = vmatpush1.bf16.msra.mxu0 %v732
    %873 = vmatprep.subr.bf16.mxu0 0
    %874 = vmatpush1.bf16.msra.mxu0 0
    %875 = vmatprep.subr.bf16.mxu0 0
    %876 = vmatpush1.bf16.msra.mxu0 0
    %877 = vmatprep.subr.bf16.mxu0 0
    %878 = vmatpush1.bf16.msra.mxu0 0
    %879 = vmatprep.subr.bf16.mxu0 0
    %880 = vmatpush1.bf16.msra.mxu0 0
    %881 = vmatprep.subr.bf16.mxu0 0
    %882 = vmatpush1.bf16.msra.mxu0 0
    %883 = vmatprep.subr.bf16.mxu0 0
    %884 = vmatpush1.bf16.msra.mxu0 0
    %885 = vmatprep.subr.bf16.mxu0 0
    %886 = vmatpush1.bf16.msra.mxu0 0
    %887 = vmatprep.mubr.bf16.mxu0 %v812
    %888 = vmatmul.mubr.bf16.gmra.mrb[0].mxu0 %v291
    %v889 = vpop.f32.mrb[0].mxu0
    %v890 = vadd.f32 %v849, %v889
    %v891 = vpop.f32.mrb[0].mxu0
    %v892 = vadd.f32 %v851, %v891
    %v893 = vpop.f32.mrb[0].mxu0
    %v894 = vpop.f32.mrb[0].mxu0
    %895 = vdwg.mxu0
    %896 = vmatprep.subr.bf16.mxu0 0
    %897 = vmatpush1.bf16.msra.mxu0 %v662
    %898 = vmatprep.subr.bf16.mxu0 0
    %899 = vmatpush1.bf16.msra.mxu0 %v665
    %900 = vmatprep.subr.bf16.mxu0 0
    %901 = vmatpush1.bf16.msra.mxu0 %v668
    %902 = vmatprep.subr.bf16.mxu0 0
    %903 = vmatpush1.bf16.msra.mxu0 %v671
    %904 = vmatprep.subr.bf16.mxu0 0
    %905 = vmatpush1.bf16.msra.mxu0 %v674
    %906 = vmatprep.subr.bf16.mxu0 0
    %907 = vmatpush1.bf16.msra.mxu0 %v677
    %908 = vmatprep.subr.bf16.mxu0 0
    %909 = vmatpush1.bf16.msra.mxu0 %v680
    %910 = vmatprep.subr.bf16.mxu0 0
    %911 = vmatpush1.bf16.msra.mxu0 %v683
    %912 = vmatprep.subr.bf16.mxu0 0
    %913 = vmatpush1.bf16.msra.mxu0 %v686
    %914 = vmatprep.subr.bf16.mxu0 0
    %915 = vmatpush1.bf16.msra.mxu0 %v689
    %916 = vmatprep.subr.bf16.mxu0 0
    %917 = vmatpush1.bf16.msra.mxu0 %v692
    %918 = vmatprep.subr.bf16.mxu0 0
    %919 = vmatpush1.bf16.msra.mxu0 %v695
    %920 = vmatprep.subr.bf16.mxu0 0
    %921 = vmatpush1.bf16.msra.mxu0 %v698
    %922 = vmatprep.subr.bf16.mxu0 0
    %923 = vmatpush1.bf16.msra.mxu0 %v701
    %924 = vmatprep.subr.bf16.mxu0 0
    %925 = vmatpush1.bf16.msra.mxu0 %v704
    %926 = vmatprep.subr.bf16.mxu0 0
    %927 = vmatpush1.bf16.msra.mxu0 %v707
    %928 = vmatprep.mubr.bf16.mxu0 %v290
    %929 = vmatmul.mubr.bf16.gmra.mrb[0].mxu0 %v289
    %v930 = vpop.f32.mrb[0].mxu0
    %v931 = vadd.f32 %v406, %v930
    %v932 = vpop.f32.mrb[0].mxu0
    %v933 = vpop.f32.mrb[0].mxu0
    %v934 = vpop.f32.mrb[0].mxu0
    %935 = vdwg.mxu0
    %936 = vmatprep.subr.bf16.mxu0 0
    %937 = vmatpush1.bf16.msra.mxu0 %v710
    %938 = vmatprep.subr.bf16.mxu0 0
    %939 = vmatpush1.bf16.msra.mxu0 %v713
    %940 = vmatprep.subr.bf16.mxu0 0
    %941 = vmatpush1.bf16.msra.mxu0 %v716
    %942 = vmatprep.subr.bf16.mxu0 0
    %943 = vmatpush1.bf16.msra.mxu0 %v719
    %944 = vmatprep.subr.bf16.mxu0 0
    %945 = vmatpush1.bf16.msra.mxu0 %v722
    %946 = vmatprep.subr.bf16.mxu0 0
    %947 = vmatpush1.bf16.msra.mxu0 %v725
    %948 = vmatprep.subr.bf16.mxu0 0
    %949 = vmatpush1.bf16.msra.mxu0 %v728
    %950 = vmatprep.subr.bf16.mxu0 0
    %951 = vmatpush1.bf16.msra.mxu0 %v731
    %952 = vmatprep.subr.bf16.mxu0 0
    %953 = vmatpush1.bf16.msra.mxu0 %v734
    %954 = vmatprep.subr.bf16.mxu0 0
    %955 = vmatpush1.bf16.msra.mxu0 0
    %956 = vmatprep.subr.bf16.mxu0 0
    %957 = vmatpush1.bf16.msra.mxu0 0
    %958 = vmatprep.subr.bf16.mxu0 0
    %959 = vmatpush1.bf16.msra.mxu0 0
    %960 = vmatprep.subr.bf16.mxu0 0
    %961 = vmatpush1.bf16.msra.mxu0 0
    %962 = vmatprep.subr.bf16.mxu0 0
    %963 = vmatpush1.bf16.msra.mxu0 0
    %964 = vmatprep.subr.bf16.mxu0 0
    %965 = vmatpush1.bf16.msra.mxu0 0
    %966 = vmatprep.subr.bf16.mxu0 0
    %967 = vmatpush1.bf16.msra.mxu0 0
    %968 = vmatprep.mubr.bf16.mxu0 %v812
    %969 = vmatmul.mubr.bf16.gmra.mrb[0].mxu0 %v291
    %v970 = vpop.f32.mrb[0].mxu0
    %v971 = vadd.f32 %v931, %v970
    %v972 = vpop.f32.mrb[0].mxu0
    %v973 = vpop.f32.mrb[0].mxu0
    %v974 = vpop.f32.mrb[0].mxu0
    %975 = vdwg.mxu0
    %v976 = vmax.f32 %v890, 0.0
    %v977 = vmax.f32 %v892, 0.0
    %v978 = vmax.f32 %v971, 0.0
    %v979 = vpack.c.bf16 %v976, %v976
    %v980 = vpack.c.bf16 %v977, %v977
    %v981 = vpack.c.bf16 %v978, %v978
    %v982 = vld [vmem:[%s7] sm:$0xff]
    %v983 = vld [vmem:[%s7 + $0x8] sm:$0xff]
    %v984 = vld [vmem:[%s7 + $0x10] sm:$0xff]
    %v985 = vld [vmem:[%s7 + $0x18] sm:$0xff]
    %v986 = vld [vmem:[%s7 + $0x20] sm:$0xff]
    %v987 = vld [vmem:[%s7 + $0x28] sm:$0xff]
    %v988 = vld [vmem:[%s7 + $0x30] sm:$0xff]
    %v989 = vld [vmem:[%s7 + $0x38] sm:$0xff]
    %v990 = vld [vmem:[%s7 + $0x40] sm:$0xff]
    %v991 = vld [vmem:[%s7 + $0x48] sm:$0xff]
    %v992 = vld [vmem:[%s7 + $0x50] sm:$0xff]
    %v993 = vld [vmem:[%s7 + $0x58] sm:$0xff]
    %v994 = vld [vmem:[%s7 + $0x60] sm:$0xff]
    %v995 = vld [vmem:[%s7 + $0x68] sm:$0xff]
    %v996 = vld [vmem:[%s7 + $0x70] sm:$0xff]
    %v997 = vld [vmem:[%s7 + $0x78] sm:$0xff]
    %v998 = vld [vmem:[%s7 + $0x80] sm:$0xff]
    %v999 = vld [vmem:[%s7 + $0x88] sm:$0xff]
    %v1000 = vld [vmem:[%s7 + $0x90] sm:$0xff]
    %v1001 = vld [vmem:[%s7 + $0x98] sm:$0xff]
    %v1002 = vld [vmem:[%s7 + $0xa0] sm:$0xff]
    %v1003 = vld [vmem:[%s7 + $0xa8] sm:$0xff]
    %v1004 = vld [vmem:[%s7 + $0xb0] sm:$0xff]
    %v1005 = vld [vmem:[%s7 + $0xb8] sm:$0xff]
    %v1006 = vld [vmem:[%s7 + $0xc0] sm:$0xff]
    %v1007 = vld [vmem:[%s7 + $0xc8] sm:$0xff]
    %v1008 = vld [vmem:[%s7 + $0xd0] sm:$0xff]
    %v1009 = vld [vmem:[%s7 + $0xd8] sm:$0xff]
    %v1010 = vld [vmem:[%s7 + $0xe0] sm:$0xff]
    %v1011 = vld [vmem:[%s7 + $0xe8] sm:$0xff]
    %v1012 = vld [vmem:[%s7 + $0xf0] sm:$0xff]
    %v1013 = vld [vmem:[%s7 + $0xf8] sm:$0xff]
    %v1014 = vld [vmem:[%s7 + $0x100] sm:$0xff]
    %v1015 = vld [vmem:[%s7 + $0x108] sm:$0xff]
    %v1016 = vld [vmem:[%s7 + $0x110] sm:$0xff]
    %v1017 = vld [vmem:[%s7 + $0x118] sm:$0xff]
    %v1018 = vld [vmem:[%s7 + $0x120] sm:$0xff]
    %v1019 = vld [vmem:[%s7 + $0x128] sm:$0x33]
    %v1020 = vld [vmem:[%s8] sm:$0x3]
    %v1022 = vlaneseq
    %v1023 = vshrl.u32 %v1022, 7
    %v1024 = vsub.s32 0, %v1023
    %v1025 = vrot.slane %v1020, %v1024
    %v1026 = vlaneseq
    %v1027 = vshrl.u32 %v1026, 7
    %v1028 = vsub.s32 1, %v1027
    %v1029 = vrot.slane %v1020, %v1028
    %v1070 = vunpack.c.l.b16 %v982
    %v1071 = vunpack.c.h.b16 %v982
    %v1072 = vunpack.c.l.b16 %v983
    %v1073 = vunpack.c.h.b16 %v983
    %v1074 = vunpack.c.l.b16 %v984
    %v1075 = vunpack.c.h.b16 %v984
    %v1076 = vunpack.c.l.b16 %v985
    %v1077 = vunpack.c.h.b16 %v985
    %v1078 = vunpack.c.l.b16 %v986
    %v1079 = vunpack.c.h.b16 %v986
    %v1080 = vunpack.c.l.b16 %v987
    %v1081 = vunpack.c.h.b16 %v987
    %v1082 = vunpack.c.l.b16 %v988
    %v1083 = vunpack.c.h.b16 %v988
    %v1084 = vunpack.c.l.b16 %v989
    %v1085 = vunpack.c.h.b16 %v989
    %v1086 = vunpack.c.l.b16 %v990
    %v1087 = vunpack.c.h.b16 %v990
    %v1088 = vunpack.c.l.b16 %v991
    %v1089 = vunpack.c.h.b16 %v991
    %v1090 = vunpack.c.l.b16 %v992
    %v1091 = vunpack.c.h.b16 %v992
    %v1092 = vunpack.c.l.b16 %v993
    %v1093 = vunpack.c.h.b16 %v993
    %v1094 = vunpack.c.l.b16 %v994
    %v1095 = vunpack.c.h.b16 %v994
    %v1096 = vunpack.c.l.b16 %v995
    %v1097 = vunpack.c.h.b16 %v995
    %v1098 = vunpack.c.l.b16 %v996
    %v1099 = vunpack.c.h.b16 %v996
    %v1100 = vunpack.c.l.b16 %v997
    %v1101 = vunpack.c.h.b16 %v997
    %v1102 = vunpack.c.l.b16 %v998
    %v1103 = vunpack.c.h.b16 %v998
    %v1104 = vunpack.c.l.b16 %v999
    %v1105 = vunpack.c.h.b16 %v999
    %v1106 = vunpack.c.l.b16 %v1000
    %v1107 = vunpack.c.h.b16 %v1000
    %v1108 = vunpack.c.l.b16 %v1001
    %v1109 = vunpack.c.h.b16 %v1001
    %v1110 = vunpack.c.l.b16 %v1002
    %v1111 = vunpack.c.h.b16 %v1002
    %v1112 = vunpack.c.l.b16 %v1003
    %v1113 = vunpack.c.h.b16 %v1003
    %v1114 = vunpack.c.l.b16 %v1004
    %v1115 = vunpack.c.h.b16 %v1004
    %v1116 = vunpack.c.l.b16 %v1005
    %v1117 = vunpack.c.h.b16 %v1005
    %v1118 = vunpack.c.l.b16 %v1006
    %v1119 = vunpack.c.h.b16 %v1006
    %v1120 = vunpack.c.l.b16 %v1007
    %v1121 = vunpack.c.h.b16 %v1007
    %v1122 = vunpack.c.l.b16 %v1008
    %v1123 = vunpack.c.h.b16 %v1008
    %v1124 = vunpack.c.l.b16 %v1009
    %v1125 = vunpack.c.h.b16 %v1009
    %v1126 = vunpack.c.l.b16 %v1010
    %v1127 = vunpack.c.h.b16 %v1010
    %v1128 = vunpack.c.l.b16 %v1011
    %v1129 = vunpack.c.h.b16 %v1011
    %v1130 = vunpack.c.l.b16 %v1012
    %v1131 = vunpack.c.h.b16 %v1012
    %v1132 = vunpack.c.l.b16 %v1013
    %v1133 = vunpack.c.h.b16 %v1013
    %v1134 = vunpack.c.l.b16 %v1014
    %v1135 = vunpack.c.h.b16 %v1014
    %v1136 = vunpack.c.l.b16 %v1015
    %v1137 = vunpack.c.h.b16 %v1015
    %v1138 = vunpack.c.l.b16 %v1016
    %v1139 = vunpack.c.h.b16 %v1016
    %v1140 = vunpack.c.l.b16 %v1017
    %v1141 = vunpack.c.h.b16 %v1017
    %v1142 = vunpack.c.l.b16 %v1018
    %v1143 = vunpack.c.h.b16 %v1018
    %v1144 = vunpack.c.l.b16 %v1019
    %v1145 = vunpack.c.h.b16 %v1019
    %v1146 = vpack.c.b16 %v1072, %v1070
    %v1147 = vpack.c.b16 %v1073, %v1071
    %v1148 = vpack.c.b16 %v1076, %v1074
    %v1149 = vpack.c.b16 %v1077, %v1075
    %v1150 = vpack.c.b16 %v1080, %v1078
    %v1151 = vpack.c.b16 %v1081, %v1079
    %v1152 = vpack.c.b16 %v1084, %v1082
    %v1153 = vpack.c.b16 %v1085, %v1083
    %v1154 = vpack.c.b16 %v1088, %v1086
    %v1155 = vpack.c.b16 %v1089, %v1087
    %v1156 = vpack.c.b16 %v1092, %v1090
    %v1157 = vpack.c.b16 %v1093, %v1091
    %v1158 = vpack.c.b16 %v1096, %v1094
    %v1159 = vpack.c.b16 %v1097, %v1095
    %v1160 = vpack.c.b16 %v1100, %v1098
    %v1161 = vpack.c.b16 %v1101, %v1099
    %v1162 = vpack.c.b16 %v1104, %v1102
    %v1163 = vpack.c.b16 %v1105, %v1103
    %v1164 = vpack.c.b16 %v1108, %v1106
    %v1165 = vpack.c.b16 %v1109, %v1107
    %v1166 = vpack.c.b16 %v1112, %v1110
    %v1167 = vpack.c.b16 %v1113, %v1111
    %v1168 = vpack.c.b16 %v1116, %v1114
    %v1169 = vpack.c.b16 %v1117, %v1115
    %v1170 = vpack.c.b16 %v1120, %v1118
    %v1171 = vpack.c.b16 %v1121, %v1119
    %v1172 = vpack.c.b16 %v1124, %v1122
    %v1173 = vpack.c.b16 %v1125, %v1123
    %v1174 = vpack.c.b16 %v1128, %v1126
    %v1175 = vpack.c.b16 %v1129, %v1127
    %v1176 = vpack.c.b16 %v1132, %v1130
    %v1177 = vpack.c.b16 %v1133, %v1131
    %v1178 = vpack.c.b16 %v1136, %v1134
    %v1179 = vpack.c.b16 %v1137, %v1135
    %v1180 = vpack.c.b16 %v1140, %v1138
    %v1181 = vpack.c.b16 %v1141, %v1139
    %v1182 = vpack.c.b16 %v1144, %v1142
    %v1183 = vpack.c.b16 %v1145, %v1143
    %vm1220 = vcmask 359424
    %v1222 = vsel %vm1220, %v981, 0
    %v1225 = vsel %vm263, %v1182, 0
    %v1228 = vsel %vm263, %v1183, 0
    %1230 = vmatprep.subr.bf16.mxu0 %v1147
    %1231 = vmatpush1.bf16.msra.mxu0 %v1146
    %1232 = vmatprep.subr.bf16.mxu0 %v1149
    %1233 = vmatpush1.bf16.msra.mxu0 %v1148
    %1234 = vmatprep.subr.bf16.mxu0 %v1151
    %1235 = vmatpush1.bf16.msra.mxu0 %v1150
    %1236 = vmatprep.subr.bf16.mxu0 %v1153
    %1237 = vmatpush1.bf16.msra.mxu0 %v1152
    %1238 = vmatprep.subr.bf16.mxu0 %v1155
    %1239 = vmatpush1.bf16.msra.mxu0 %v1154
    %1240 = vmatprep.subr.bf16.mxu0 %v1157
    %1241 = vmatpush1.bf16.msra.mxu0 %v1156
    %1242 = vmatprep.subr.bf16.mxu0 %v1159
    %1243 = vmatpush1.bf16.msra.mxu0 %v1158
    %1244 = vmatprep.subr.bf16.mxu0 %v1161
    %1245 = vmatpush1.bf16.msra.mxu0 %v1160
    %1246 = vmatprep.subr.bf16.mxu0 %v1163
    %1247 = vmatpush1.bf16.msra.mxu0 %v1162
    %1248 = vmatprep.subr.bf16.mxu0 %v1165
    %1249 = vmatpush1.bf16.msra.mxu0 %v1164
    %1250 = vmatprep.subr.bf16.mxu0 %v1167
    %1251 = vmatpush1.bf16.msra.mxu0 %v1166
    %1252 = vmatprep.subr.bf16.mxu0 %v1169
    %1253 = vmatpush1.bf16.msra.mxu0 %v1168
    %1254 = vmatprep.subr.bf16.mxu0 %v1171
    %1255 = vmatpush1.bf16.msra.mxu0 %v1170
    %1256 = vmatprep.subr.bf16.mxu0 %v1173
    %1257 = vmatpush1.bf16.msra.mxu0 %v1172
    %1258 = vmatprep.subr.bf16.mxu0 %v1175
    %1259 = vmatpush1.bf16.msra.mxu0 %v1174
    %1260 = vmatprep.subr.bf16.mxu0 %v1177
    %1261 = vmatpush1.bf16.msra.mxu0 %v1176
    %1262 = vmatprep.mubr.bf16.mxu0 %v980
    %1263 = vmatmul.mubr.bf16.gmra.mrb[0].mxu0 %v979
    %v1264 = vpop.f32.mrb[0].mxu0
    %v1265 = vadd.f32 %v1025, %v1264
    %v1266 = vpop.f32.mrb[0].mxu0
    %v1267 = vadd.f32 %v1029, %v1266
    %v1268 = vpop.f32.mrb[0].mxu0
    %v1269 = vpop.f32.mrb[0].mxu0
    %1270 = vdwg.mxu0
    %1271 = vmatprep.subr.bf16.mxu0 %v1179
    %1272 = vmatpush1.bf16.msra.mxu0 %v1178
    %1273 = vmatprep.subr.bf16.mxu0 %v1181
    %1274 = vmatpush1.bf16.msra.mxu0 %v1180
    %1275 = vmatprep.subr.bf16.mxu0 %v1228
    %1276 = vmatpush1.bf16.msra.mxu0 %v1225
    %1277 = vmatprep.subr.bf16.mxu0 0
    %1278 = vmatpush1.bf16.msra.mxu0 0
    %1279 = vmatprep.subr.bf16.mxu0 0
    %1280 = vmatpush1.bf16.msra.mxu0 0
    %1281 = vmatprep.subr.bf16.mxu0 0
    %1282 = vmatpush1.bf16.msra.mxu0 0
    %1283 = vmatprep.subr.bf16.mxu0 0
    %1284 = vmatpush1.bf16.msra.mxu0 0
    %1285 = vmatprep.subr.bf16.mxu0 0
    %1286 = vmatpush1.bf16.msra.mxu0 0
    %1287 = vmatprep.subr.bf16.mxu0 0
    %1288 = vmatpush1.bf16.msra.mxu0 0
    %1289 = vmatprep.subr.bf16.mxu0 0
    %1290 = vmatpush1.bf16.msra.mxu0 0
    %1291 = vmatprep.subr.bf16.mxu0 0
    %1292 = vmatpush1.bf16.msra.mxu0 0
    %1293 = vmatprep.subr.bf16.mxu0 0
    %1294 = vmatpush1.bf16.msra.mxu0 0
    %1295 = vmatprep.subr.bf16.mxu0 0
    %1296 = vmatpush1.bf16.msra.mxu0 0
    %1297 = vmatprep.subr.bf16.mxu0 0
    %1298 = vmatpush1.bf16.msra.mxu0 0
    %1299 = vmatprep.subr.bf16.mxu0 0
    %1300 = vmatpush1.bf16.msra.mxu0 0
    %1301 = vmatprep.subr.bf16.mxu0 0
    %1302 = vmatpush1.bf16.msra.mxu0 0
    %1303 = vmatprep.mubr.bf16.mxu0 0
    %1304 = vmatmul.mubr.bf16.gmra.mrb[0].mxu0 %v1222
    %v1305 = vpop.f32.mrb[0].mxu0
    %v1306 = vadd.f32 %v1265, %v1305
    %v1307 = vpop.f32.mrb[0].mxu0
    %v1308 = vadd.f32 %v1267, %v1307
    %v1309 = vpop.f32.mrb[0].mxu0
    %v1310 = vpop.f32.mrb[0].mxu0
    %1311 = vdwg.mxu0
    %v1312 = vmax.f32 %v1306, 0.0
    %v1313 = vmax.f32 %v1308, 0.0
    %v1314 = vpack.c.bf16 %v1312, %v1312
    %v1315 = vpack.c.bf16 %v1313, %v1313
    %v1316 = vld [vmem:[%s9] sm:$0xf]
    %v1317 = vld [vmem:[%s9 + $0x4] sm:$0xf]
    %v1318 = vld [vmem:[%s9 + $0x8] sm:$0xf]
    %v1319 = vld [vmem:[%s9 + $0xc] sm:$0xf]
    %v1320 = vld [vmem:[%s9 + $0x10] sm:$0xf]
    %v1321 = vld [vmem:[%s9 + $0x14] sm:$0xf]
    %v1322 = vld [vmem:[%s9 + $0x18] sm:$0xf]
    %v1323 = vld [vmem:[%s9 + $0x1c] sm:$0xf]
    %v1324 = vld [vmem:[%s9 + $0x20] sm:$0xf]
    %v1325 = vld [vmem:[%s9 + $0x24] sm:$0xf]
    %v1326 = vld [vmem:[%s9 + $0x28] sm:$0xf]
    %v1327 = vld [vmem:[%s9 + $0x2c] sm:$0xf]
    %v1328 = vld [vmem:[%s9 + $0x30] sm:$0xf]
    %v1329 = vld [vmem:[%s9 + $0x34] sm:$0xf]
    %v1330 = vld [vmem:[%s9 + $0x38] sm:$0xf]
    %v1331 = vld [vmem:[%s9 + $0x3c] sm:$0xf]
    %v1332 = vld [vmem:[%s9 + $0x40] sm:$0xf]
    %v1333 = vld [vmem:[%s9 + $0x44] sm:$0xf]
    %v1334 = vld [vmem:[%s9 + $0x48] sm:$0xf]
    %v1335 = vld [vmem:[%s9 + $0x4c] sm:$0xf]
    %v1336 = vld [vmem:[%s9 + $0x50] sm:$0xf]
    %v1337 = vld [vmem:[%s9 + $0x54] sm:$0xf]
    %v1338 = vld [vmem:[%s9 + $0x58] sm:$0xf]
    %v1339 = vld [vmem:[%s9 + $0x5c] sm:$0xf]
    %v1340 = vld [vmem:[%s9 + $0x60] sm:$0xf]
    %v1341 = vld [vmem:[%s10] sm:$0x1]
    %v1343 = vlaneseq
    %v1344 = vshrl.u32 %v1343, 7
    %v1345 = vsub.s32 0, %v1344
    %v1346 = vrot.slane %v1341, %v1345
    %v1373 = vunpack.c.l.b16 %v1316
    %v1374 = vunpack.c.l.b16 %v1317
    %v1375 = vunpack.c.l.b16 %v1318
    %v1376 = vunpack.c.l.b16 %v1319
    %v1377 = vunpack.c.l.b16 %v1320
    %v1378 = vunpack.c.l.b16 %v1321
    %v1379 = vunpack.c.l.b16 %v1322
    %v1380 = vunpack.c.l.b16 %v1323
    %v1381 = vunpack.c.l.b16 %v1324
    %v1382 = vunpack.c.l.b16 %v1325
    %v1383 = vunpack.c.l.b16 %v1326
    %v1384 = vunpack.c.l.b16 %v1327
    %v1385 = vunpack.c.l.b16 %v1328
    %v1386 = vunpack.c.l.b16 %v1329
    %v1387 = vunpack.c.l.b16 %v1330
    %v1388 = vunpack.c.l.b16 %v1331
    %v1389 = vunpack.c.l.b16 %v1332
    %v1390 = vunpack.c.l.b16 %v1333
    %v1391 = vunpack.c.l.b16 %v1334
    %v1392 = vunpack.c.l.b16 %v1335
    %v1393 = vunpack.c.l.b16 %v1336
    %v1394 = vunpack.c.l.b16 %v1337
    %v1395 = vunpack.c.l.b16 %v1338
    %v1396 = vunpack.c.l.b16 %v1339
    %v1397 = vunpack.c.l.b16 %v1340
    %v1398 = vpack.c.b16 %v1374, %v1373
    %v1399 = vpack.c.b16 %v1376, %v1375
    %v1400 = vpack.c.b16 %v1378, %v1377
    %v1401 = vpack.c.b16 %v1380, %v1379
    %v1402 = vpack.c.b16 %v1382, %v1381
    %v1403 = vpack.c.b16 %v1384, %v1383
    %v1404 = vpack.c.b16 %v1386, %v1385
    %v1405 = vpack.c.b16 %v1388, %v1387
    %v1406 = vpack.c.b16 %v1390, %v1389
    %v1407 = vpack.c.b16 %v1392, %v1391
    %v1408 = vpack.c.b16 %v1394, %v1393
    %v1409 = vpack.c.b16 %v1396, %v1395
    %v1410 = vpack.c.b16 %v1397, %v1397
    %vm1423 = vcmask 588800
    %v1425 = vsel %vm1423, %v1315, 0
    %v1428 = vsel %vm261, %v1410, 0
    %1430 = vmatprep.subr.bf16.mxu0 0
    %1431 = vmatpush1.bf16.msra.mxu0 %v1398
    %1432 = vmatprep.subr.bf16.mxu0 0
    %1433 = vmatpush1.bf16.msra.mxu0 %v1399
    %1434 = vmatprep.subr.bf16.mxu0 0
    %1435 = vmatpush1.bf16.msra.mxu0 %v1400
    %1436 = vmatprep.subr.bf16.mxu0 0
    %1437 = vmatpush1.bf16.msra.mxu0 %v1401
    %1438 = vmatprep.subr.bf16.mxu0 0
    %1439 = vmatpush1.bf16.msra.mxu0 %v1402
    %1440 = vmatprep.subr.bf16.mxu0 0
    %1441 = vmatpush1.bf16.msra.mxu0 %v1403
    %1442 = vmatprep.subr.bf16.mxu0 0
    %1443 = vmatpush1.bf16.msra.mxu0 %v1404
    %1444 = vmatprep.subr.bf16.mxu0 0
    %1445 = vmatpush1.bf16.msra.mxu0 %v1405
    %1446 = vmatprep.subr.bf16.mxu0 0
    %1447 = vmatpush1.bf16.msra.mxu0 %v1406
    %1448 = vmatprep.subr.bf16.mxu0 0
    %1449 = vmatpush1.bf16.msra.mxu0 %v1407
    %1450 = vmatprep.subr.bf16.mxu0 0
    %1451 = vmatpush1.bf16.msra.mxu0 %v1408
    %1452 = vmatprep.subr.bf16.mxu0 0
    %1453 = vmatpush1.bf16.msra.mxu0 %v1409
    %1454 = vmatprep.subr.bf16.mxu0 0
    %1455 = vmatpush1.bf16.msra.mxu0 %v1428
    %1456 = vmatprep.subr.bf16.mxu0 0
    %1457 = vmatpush1.bf16.msra.mxu0 0
    %1458 = vmatprep.subr.bf16.mxu0 0
    %1459 = vmatpush1.bf16.msra.mxu0 0
    %1460 = vmatprep.subr.bf16.mxu0 0
    %1461 = vmatpush1.bf16.msra.mxu0 0
    %1462 = vmatprep.mubr.bf16.mxu0 %v1425
    %1463 = vmatmul.mubr.bf16.gmra.mrb[0].mxu0 %v1314
    %v1464 = vpop.f32.mrb[0].mxu0
    %v1465 = vadd.f32 %v1346, %v1464
    %v1466 = vpop.f32.mrb[0].mxu0
    %v1467 = vpop.f32.mrb[0].mxu0
    %v1468 = vpop.f32.mrb[0].mxu0
    %1469 = vdwg.mxu0
    %v1470 = vlaneseq
    %v1471 = vand.u32 %v1470, 127
    %vm1472 = vcmp.lt.s32.totalorder %v1471, 82
    %v1473 = vsel %vm1472, %v1465, -1e+30
    %v1474 = vsel %vm259, %v1473, -inf
    %1475 = vmax.xlane.f32.xlu0 %v1474
    %v1476 = vpop.xlane.xlu0 %1475
    %v1477 = vsub.f32 %v1473, %v1476
    %v1478 = vmul.f32 %v1477, 1.442695
    %v1479 = vpow.pop %v1478
    %v1480 = vsel %vm259, %v1479, 0.0
    %1481 = vadd.xlane.f32.xlu0 %v1480
    %v1482 = vpop.xlane.xlu0 %1481
    %v1483 = vrcp.pop %v1482
    %v1484 = vmul.f32 %v1479, %v1483
    %1485 = vst [vmem:[#allocation2] sm:$0x3] %v1484
    %v1486 = vld [vmem:[%s11] sm:$0xff]
    %v1487 = vld [vmem:[%s11 + $0x8] sm:$0xff]
    %v1488 = vld [vmem:[%s11 + $0x10] sm:$0xff]
    %v1489 = vld [vmem:[%s11 + $0x18] sm:$0xff]
    %v1490 = vld [vmem:[%s11 + $0x20] sm:$0xff]
    %v1491 = vld [vmem:[%s11 + $0x28] sm:$0xff]
    %v1492 = vld [vmem:[%s11 + $0x30] sm:$0xff]
    %v1493 = vld [vmem:[%s11 + $0x38] sm:$0xff]
    %v1494 = vld [vmem:[%s11 + $0x40] sm:$0xff]
    %v1495 = vld [vmem:[%s11 + $0x48] sm:$0xff]
    %v1496 = vld [vmem:[%s11 + $0x50] sm:$0xff]
    %v1497 = vld [vmem:[%s11 + $0x58] sm:$0xff]
    %v1498 = vld [vmem:[%s11 + $0x60] sm:$0xff]
    %v1499 = vld [vmem:[%s11 + $0x68] sm:$0xff]
    %v1500 = vld [vmem:[%s11 + $0x70] sm:$0xff]
    %v1501 = vld [vmem:[%s11 + $0x78] sm:$0xff]
    %v1502 = vld [vmem:[%s11 + $0x80] sm:$0xff]
    %v1503 = vld [vmem:[%s11 + $0x88] sm:$0xff]
    %v1504 = vld [vmem:[%s11 + $0x90] sm:$0xff]
    %v1505 = vld [vmem:[%s11 + $0x98] sm:$0xff]
    %v1506 = vld [vmem:[%s11 + $0xa0] sm:$0xff]
    %v1507 = vld [vmem:[%s11 + $0xa8] sm:$0xff]
    %v1508 = vld [vmem:[%s11 + $0xb0] sm:$0xff]
    %v1509 = vld [vmem:[%s11 + $0xb8] sm:$0xff]
    %v1510 = vld [vmem:[%s11 + $0xc0] sm:$0xff]
    %v1511 = vld [vmem:[%s11 + $0xc8] sm:$0xff]
    %v1512 = vld [vmem:[%s11 + $0xd0] sm:$0xff]
    %v1513 = vld [vmem:[%s11 + $0xd8] sm:$0xff]
    %v1514 = vld [vmem:[%s11 + $0xe0] sm:$0xff]
    %v1515 = vld [vmem:[%s11 + $0xe8] sm:$0xff]
    %v1516 = vld [vmem:[%s11 + $0xf0] sm:$0xff]
    %v1517 = vld [vmem:[%s11 + $0xf8] sm:$0xff]
    %v1518 = vld [vmem:[%s11 + $0x100] sm:$0xff]
    %v1519 = vld [vmem:[%s11 + $0x108] sm:$0xff]
    %v1520 = vld [vmem:[%s11 + $0x110] sm:$0xff]
    %v1521 = vld [vmem:[%s11 + $0x118] sm:$0xff]
    %v1522 = vld [vmem:[%s11 + $0x120] sm:$0xff]
    %v1523 = vld [vmem:[%s11 + $0x128] sm:$0xff]
    %v1524 = vld [vmem:[%s11 + $0x130] sm:$0xff]
    %v1525 = vld [vmem:[%s11 + $0x138] sm:$0xff]
    %v1526 = vld [vmem:[%s11 + $0x140] sm:$0xff]
    %v1527 = vld [vmem:[%s11 + $0x148] sm:$0xff]
    %v1528 = vld [vmem:[%s11 + $0x150] sm:$0xff]
    %v1529 = vld [vmem:[%s11 + $0x158] sm:$0xff]
    %v1530 = vld [vmem:[%s11 + $0x160] sm:$0xff]
    %v1531 = vld [vmem:[%s11 + $0x168] sm:$0xff]
    %v1532 = vld [vmem:[%s11 + $0x170] sm:$0xff]
    %v1533 = vld [vmem:[%s11 + $0x178] sm:$0xff]
    %v1534 = vld [vmem:[%s11 + $0x180] sm:$0xff]
    %v1535 = vld [vmem:[%s11 + $0x188] sm:$0xff]
    %v1536 = vld [vmem:[%s12] sm:$0x3]
    %v1538 = vlaneseq
    %v1539 = vshrl.u32 %v1538, 7
    %v1540 = vsub.s32 0, %v1539
    %v1541 = vrot.slane %v1536, %v1540
    %v1542 = vlaneseq
    %v1543 = vshrl.u32 %v1542, 7
    %v1544 = vsub.s32 1, %v1543
    %v1545 = vrot.slane %v1536, %v1544
    %v1598 = vunpack.c.l.b16 %v1486
    %v1599 = vunpack.c.h.b16 %v1486
    %v1600 = vunpack.c.l.b16 %v1487
    %v1601 = vunpack.c.h.b16 %v1487
    %v1602 = vunpack.c.l.b16 %v1488
    %v1603 = vunpack.c.h.b16 %v1488
    %v1604 = vunpack.c.l.b16 %v1489
    %v1605 = vunpack.c.h.b16 %v1489
    %v1606 = vunpack.c.l.b16 %v1490
    %v1607 = vunpack.c.h.b16 %v1490
    %v1608 = vunpack.c.l.b16 %v1491
    %v1609 = vunpack.c.h.b16 %v1491
    %v1610 = vunpack.c.l.b16 %v1492
    %v1611 = vunpack.c.h.b16 %v1492
    %v1612 = vunpack.c.l.b16 %v1493
    %v1613 = vunpack.c.h.b16 %v1493
    %v1614 = vunpack.c.l.b16 %v1494
    %v1615 = vunpack.c.h.b16 %v1494
    %v1616 = vunpack.c.l.b16 %v1495
    %v1617 = vunpack.c.h.b16 %v1495
    %v1618 = vunpack.c.l.b16 %v1496
    %v1619 = vunpack.c.h.b16 %v1496
    %v1620 = vunpack.c.l.b16 %v1497
    %v1621 = vunpack.c.h.b16 %v1497
    %v1622 = vunpack.c.l.b16 %v1498
    %v1623 = vunpack.c.h.b16 %v1498
    %v1624 = vunpack.c.l.b16 %v1499
    %v1625 = vunpack.c.h.b16 %v1499
    %v1626 = vunpack.c.l.b16 %v1500
    %v1627 = vunpack.c.h.b16 %v1500
    %v1628 = vunpack.c.l.b16 %v1501
    %v1629 = vunpack.c.h.b16 %v1501
    %v1630 = vunpack.c.l.b16 %v1502
    %v1631 = vunpack.c.h.b16 %v1502
    %v1632 = vunpack.c.l.b16 %v1503
    %v1633 = vunpack.c.h.b16 %v1503
    %v1634 = vunpack.c.l.b16 %v1504
    %v1635 = vunpack.c.h.b16 %v1504
    %v1636 = vunpack.c.l.b16 %v1505
    %v1637 = vunpack.c.h.b16 %v1505
    %v1638 = vunpack.c.l.b16 %v1506
    %v1639 = vunpack.c.h.b16 %v1506
    %v1640 = vunpack.c.l.b16 %v1507
    %v1641 = vunpack.c.h.b16 %v1507
    %v1642 = vunpack.c.l.b16 %v1508
    %v1643 = vunpack.c.h.b16 %v1508
    %v1644 = vunpack.c.l.b16 %v1509
    %v1645 = vunpack.c.h.b16 %v1509
    %v1646 = vunpack.c.l.b16 %v1510
    %v1647 = vunpack.c.h.b16 %v1510
    %v1648 = vunpack.c.l.b16 %v1511
    %v1649 = vunpack.c.h.b16 %v1511
    %v1650 = vunpack.c.l.b16 %v1512
    %v1651 = vunpack.c.h.b16 %v1512
    %v1652 = vunpack.c.l.b16 %v1513
    %v1653 = vunpack.c.h.b16 %v1513
    %v1654 = vunpack.c.l.b16 %v1514
    %v1655 = vunpack.c.h.b16 %v1514
    %v1656 = vunpack.c.l.b16 %v1515
    %v1657 = vunpack.c.h.b16 %v1515
    %v1658 = vunpack.c.l.b16 %v1516
    %v1659 = vunpack.c.h.b16 %v1516
    %v1660 = vunpack.c.l.b16 %v1517
    %v1661 = vunpack.c.h.b16 %v1517
    %v1662 = vunpack.c.l.b16 %v1518
    %v1663 = vunpack.c.h.b16 %v1518
    %v1664 = vunpack.c.l.b16 %v1519
    %v1665 = vunpack.c.h.b16 %v1519
    %v1666 = vunpack.c.l.b16 %v1520
    %v1667 = vunpack.c.h.b16 %v1520
    %v1668 = vunpack.c.l.b16 %v1521
    %v1669 = vunpack.c.h.b16 %v1521
    %v1670 = vunpack.c.l.b16 %v1522
    %v1671 = vunpack.c.h.b16 %v1522
    %v1672 = vunpack.c.l.b16 %v1523
    %v1673 = vunpack.c.h.b16 %v1523
    %v1674 = vunpack.c.l.b16 %v1524
    %v1675 = vunpack.c.h.b16 %v1524
    %v1676 = vunpack.c.l.b16 %v1525
    %v1677 = vunpack.c.h.b16 %v1525
    %v1678 = vunpack.c.l.b16 %v1526
    %v1679 = vunpack.c.h.b16 %v1526
    %v1680 = vunpack.c.l.b16 %v1527
    %v1681 = vunpack.c.h.b16 %v1527
    %v1682 = vunpack.c.l.b16 %v1528
    %v1683 = vunpack.c.h.b16 %v1528
    %v1684 = vunpack.c.l.b16 %v1529
    %v1685 = vunpack.c.h.b16 %v1529
    %v1686 = vunpack.c.l.b16 %v1530
    %v1687 = vunpack.c.h.b16 %v1530
    %v1688 = vunpack.c.l.b16 %v1531
    %v1689 = vunpack.c.h.b16 %v1531
    %v1690 = vunpack.c.l.b16 %v1532
    %v1691 = vunpack.c.h.b16 %v1532
    %v1692 = vunpack.c.l.b16 %v1533
    %v1693 = vunpack.c.h.b16 %v1533
    %v1694 = vunpack.c.l.b16 %v1534
    %v1695 = vunpack.c.h.b16 %v1534
    %v1696 = vunpack.c.l.b16 %v1535
    %v1697 = vunpack.c.h.b16 %v1535
    %v1698 = vpack.c.b16 %v1600, %v1598
    %v1699 = vpack.c.b16 %v1601, %v1599
    %v1700 = vpack.c.b16 %v1604, %v1602
    %v1701 = vpack.c.b16 %v1605, %v1603
    %v1702 = vpack.c.b16 %v1608, %v1606
    %v1703 = vpack.c.b16 %v1609, %v1607
    %v1704 = vpack.c.b16 %v1612, %v1610
    %v1705 = vpack.c.b16 %v1613, %v1611
    %v1706 = vpack.c.b16 %v1616, %v1614
    %v1707 = vpack.c.b16 %v1617, %v1615
    %v1708 = vpack.c.b16 %v1620, %v1618
    %v1709 = vpack.c.b16 %v1621, %v1619
    %v1710 = vpack.c.b16 %v1624, %v1622
    %v1711 = vpack.c.b16 %v1625, %v1623
    %v1712 = vpack.c.b16 %v1628, %v1626
    %v1713 = vpack.c.b16 %v1629, %v1627
    %v1714 = vpack.c.b16 %v1632, %v1630
    %v1715 = vpack.c.b16 %v1633, %v1631
    %v1716 = vpack.c.b16 %v1636, %v1634
    %v1717 = vpack.c.b16 %v1637, %v1635
    %v1718 = vpack.c.b16 %v1640, %v1638
    %v1719 = vpack.c.b16 %v1641, %v1639
    %v1720 = vpack.c.b16 %v1644, %v1642
    %v1721 = vpack.c.b16 %v1645, %v1643
    %v1722 = vpack.c.b16 %v1648, %v1646
    %v1723 = vpack.c.b16 %v1649, %v1647
    %v1724 = vpack.c.b16 %v1652, %v1650
    %v1725 = vpack.c.b16 %v1653, %v1651
    %v1726 = vpack.c.b16 %v1656, %v1654
    %v1727 = vpack.c.b16 %v1657, %v1655
    %v1728 = vpack.c.b16 %v1660, %v1658
    %v1729 = vpack.c.b16 %v1661, %v1659
    %v1730 = vpack.c.b16 %v1664, %v1662
    %v1731 = vpack.c.b16 %v1665, %v1663
    %v1732 = vpack.c.b16 %v1668, %v1666
    %v1733 = vpack.c.b16 %v1669, %v1667
    %v1734 = vpack.c.b16 %v1672, %v1670
    %v1735 = vpack.c.b16 %v1673, %v1671
    %v1736 = vpack.c.b16 %v1676, %v1674
    %v1737 = vpack.c.b16 %v1677, %v1675
    %v1738 = vpack.c.b16 %v1680, %v1678
    %v1739 = vpack.c.b16 %v1681, %v1679
    %v1740 = vpack.c.b16 %v1684, %v1682
    %v1741 = vpack.c.b16 %v1685, %v1683
    %v1742 = vpack.c.b16 %v1688, %v1686
    %v1743 = vpack.c.b16 %v1689, %v1687
    %v1744 = vpack.c.b16 %v1692, %v1690
    %v1745 = vpack.c.b16 %v1693, %v1691
    %v1746 = vpack.c.b16 %v1696, %v1694
    %v1747 = vpack.c.b16 %v1697, %v1695
    %1798 = vmatprep.subr.bf16.mxu0 %v1699
    %1799 = vmatpush1.bf16.msra.mxu0 %v1698
    %1800 = vmatprep.subr.bf16.mxu0 %v1701
    %1801 = vmatpush1.bf16.msra.mxu0 %v1700
    %1802 = vmatprep.subr.bf16.mxu0 %v1703
    %1803 = vmatpush1.bf16.msra.mxu0 %v1702
    %1804 = vmatprep.subr.bf16.mxu0 %v1705
    %1805 = vmatpush1.bf16.msra.mxu0 %v1704
    %1806 = vmatprep.subr.bf16.mxu0 %v1707
    %1807 = vmatpush1.bf16.msra.mxu0 %v1706
    %1808 = vmatprep.subr.bf16.mxu0 %v1709
    %1809 = vmatpush1.bf16.msra.mxu0 %v1708
    %1810 = vmatprep.subr.bf16.mxu0 %v1711
    %1811 = vmatpush1.bf16.msra.mxu0 %v1710
    %1812 = vmatprep.subr.bf16.mxu0 %v1713
    %1813 = vmatpush1.bf16.msra.mxu0 %v1712
    %1814 = vmatprep.subr.bf16.mxu0 %v1715
    %1815 = vmatpush1.bf16.msra.mxu0 %v1714
    %1816 = vmatprep.subr.bf16.mxu0 %v1717
    %1817 = vmatpush1.bf16.msra.mxu0 %v1716
    %1818 = vmatprep.subr.bf16.mxu0 %v1719
    %1819 = vmatpush1.bf16.msra.mxu0 %v1718
    %1820 = vmatprep.subr.bf16.mxu0 %v1721
    %1821 = vmatpush1.bf16.msra.mxu0 %v1720
    %1822 = vmatprep.subr.bf16.mxu0 %v1723
    %1823 = vmatpush1.bf16.msra.mxu0 %v1722
    %1824 = vmatprep.subr.bf16.mxu0 %v1725
    %1825 = vmatpush1.bf16.msra.mxu0 %v1724
    %1826 = vmatprep.subr.bf16.mxu0 %v1727
    %1827 = vmatpush1.bf16.msra.mxu0 %v1726
    %1828 = vmatprep.subr.bf16.mxu0 %v1729
    %1829 = vmatpush1.bf16.msra.mxu0 %v1728
    %1830 = vmatprep.mubr.bf16.mxu0 %v290
    %1831 = vmatmul.mubr.bf16.gmra.mrb[0].mxu0 %v289
    %v1832 = vpop.f32.mrb[0].mxu0
    %v1833 = vadd.f32 %v1541, %v1832
    %v1834 = vpop.f32.mrb[0].mxu0
    %v1835 = vadd.f32 %v1545, %v1834
    %v1836 = vpop.f32.mrb[0].mxu0
    %v1837 = vpop.f32.mrb[0].mxu0
    %1838 = vdwg.mxu0
    %1839 = vmatprep.subr.bf16.mxu0 %v1731
    %1840 = vmatpush1.bf16.msra.mxu0 %v1730
    %1841 = vmatprep.subr.bf16.mxu0 %v1733
    %1842 = vmatpush1.bf16.msra.mxu0 %v1732
    %1843 = vmatprep.subr.bf16.mxu0 %v1735
    %1844 = vmatpush1.bf16.msra.mxu0 %v1734
    %1845 = vmatprep.subr.bf16.mxu0 %v1737
    %1846 = vmatpush1.bf16.msra.mxu0 %v1736
    %1847 = vmatprep.subr.bf16.mxu0 %v1739
    %1848 = vmatpush1.bf16.msra.mxu0 %v1738
    %1849 = vmatprep.subr.bf16.mxu0 %v1741
    %1850 = vmatpush1.bf16.msra.mxu0 %v1740
    %1851 = vmatprep.subr.bf16.mxu0 %v1743
    %1852 = vmatpush1.bf16.msra.mxu0 %v1742
    %1853 = vmatprep.subr.bf16.mxu0 %v1745
    %1854 = vmatpush1.bf16.msra.mxu0 %v1744
    %1855 = vmatprep.subr.bf16.mxu0 %v1747
    %1856 = vmatpush1.bf16.msra.mxu0 %v1746
    %1857 = vmatprep.subr.bf16.mxu0 0
    %1858 = vmatpush1.bf16.msra.mxu0 0
    %1859 = vmatprep.subr.bf16.mxu0 0
    %1860 = vmatpush1.bf16.msra.mxu0 0
    %1861 = vmatprep.subr.bf16.mxu0 0
    %1862 = vmatpush1.bf16.msra.mxu0 0
    %1863 = vmatprep.subr.bf16.mxu0 0
    %1864 = vmatpush1.bf16.msra.mxu0 0
    %1865 = vmatprep.subr.bf16.mxu0 0
    %1866 = vmatpush1.bf16.msra.mxu0 0
    %1867 = vmatprep.subr.bf16.mxu0 0
    %1868 = vmatpush1.bf16.msra.mxu0 0
    %1869 = vmatprep.subr.bf16.mxu0 0
    %1870 = vmatpush1.bf16.msra.mxu0 0
    %1871 = vmatprep.mubr.bf16.mxu0 %v812
    %1872 = vmatmul.mubr.bf16.gmra.mrb[0].mxu0 %v291
    %v1873 = vpop.f32.mrb[0].mxu0
    %v1874 = vadd.f32 %v1833, %v1873
    %v1875 = vpop.f32.mrb[0].mxu0
    %v1876 = vadd.f32 %v1835, %v1875
    %v1877 = vpop.f32.mrb[0].mxu0
    %v1878 = vpop.f32.mrb[0].mxu0
    %1879 = vdwg.mxu0
    %v1880 = vmax.f32 %v1874, 0.0
    %v1881 = vmax.f32 %v1876, 0.0
    %v1884 = vcombine.low %v1880, %v1881
    %v1886 = vunpack.c.l.s4 1983009808
    %v1887 = vunpack.c.0.s8 %v1886
    %v1888 = vlaneseq
    %v1889 = vshrl.u32 %v1888, 7
    %v1890 = vsub.s32 %v1887, %v1889
    %v1891 = vrot.slane %v1884, %v1890
    %1893 = vst [vmem:[#allocation4] sm:$0xf] %v1891
    // Predicated region
    $region54: #{pvnet_forward.1} parent=1 // pred_check
      _
    $region55: #{pvnet_forward.1} parent=1 // pred_check_branch
      %1895 = sbr.rel (0) target = $region57
    $region56: #{pvnet_forward.1} parent=1 // pred_region
      _
    $region57: #{pvnet_forward.1} parent=1 // pred_fallthru
      _
    // Predicated region
    $region58: #{pvnet_forward.1} parent=1 // pred_check
      _
    $region59: #{pvnet_forward.1} parent=1 // pred_check_branch
      %1897 = sbr.rel (0) target = $region61
    $region60: #{pvnet_forward.1} parent=1 // pred_region
      %s1899 = ssub.s32 32, 32
      %1900 = vsyncadd [#allocation3], %s1899
      %s1902 = sshll.u32 [#allocation2], 4
      %s1903 = int_to_ptr.vmem [resolvable:$true] %s1902
      %1905 = dma.vmem_to_hbm [thread:$0]  %s1903, 32, %s14, [#allocation3]
    $region61: #{pvnet_forward.1} parent=1 // pred_fallthru
      _
    // Predicated region
    $region62: #{pvnet_forward.1} parent=1 // pred_check
      _
    $region63: #{pvnet_forward.1} parent=1 // pred_check_branch
      %1907 = sbr.rel (0) target = $region65
    $region64: #{pvnet_forward.1} parent=1 // pred_region
      %s1909 = ssub.s32 64, 64
      %1910 = vsyncadd [#allocation5], %s1909
      %s1912 = sshll.u32 [#allocation4], 4
      %s1913 = int_to_ptr.vmem [resolvable:$true] %s1912
      %1915 = dma.vmem_to_hbm [thread:$0]  %s1913, 64, %s15, [#allocation5]
    $region65: #{pvnet_forward.1} parent=1 // pred_fallthru
      _
    // Predicated region
    $region66: #{pvnet_forward.1} parent=1 // pred_check
      _
    $region67: #{pvnet_forward.1} parent=1 // pred_check_branch
      %1917 = sbr.rel (0) target = $region69
    $region68: #{pvnet_forward.1} parent=1 // pred_region
      _
    $region69: #{pvnet_forward.1} parent=1 // pred_fallthru
      _
    // Predicated region
    $region70: #{pvnet_forward.1} parent=1 // pred_check
      _
    $region71: #{pvnet_forward.1} parent=1 // pred_check_branch
      %1919 = sbr.rel (0) target = $region73
    $region72: #{pvnet_forward.1} parent=1 // pred_region
      %1920 = dma.done [#allocation3], 32
    $region73: #{pvnet_forward.1} parent=1 // pred_fallthru
      _
    // Predicated region
    $region74: #{pvnet_forward.1} parent=1 // pred_check
      _
    $region75: #{pvnet_forward.1} parent=1 // pred_check_branch
      %1922 = sbr.rel (0) target = $region77
    $region76: #{pvnet_forward.1} parent=1 // pred_region
      %1923 = dma.done [#allocation5], 64
    $region77: #{pvnet_forward.1} parent=1 // pred_fallthru
      _
    %1924 = vsyncpa [#allocation3], 1
    %1925 = vsyncpa [#allocation5], 1

</llo_original>
